<compile_context>
chip_gen: v6e
topology: v6e:2x2x1
jax: 0.10.0
libtpu: 0.0.40
codegen_flags: <defaults>
</compile_context>

<pallas_src>
import jax
import jax.numpy as jnp
import numpy as np
from jax import lax
from jax.experimental import pallas as pl
from jax.experimental.pallas import tpu as pltpu

LN_EPS = 1e-5         # nn.LayerNorm default eps
GCP_NORM_EPS = 1e-8   # GCPLayerNorm eps
SAFE_NORM_EPS = 1e-8  # safe_norm eps

VMEM_LIMIT_BYTES = 48 * 1024 * 1024   # fits v7x's 64 MiB physical VMEM with headroom


def _round_up(x, m):
    return ((x + m - 1) // m) * m


# ---------------------------------------------------------------------------
# Kernel A: scatter-add of per-edge frame slabs (+ count lane) onto nodes.
# ---------------------------------------------------------------------------
def frame_scatter_kernel(row_ref, fr_ref, acc_ref):
    """row_ref: SMEM [E_pad] int32; fr_ref: VMEM [te, 28]; acc_ref: VMEM [N, 28]."""

    @pl.when(pl.program_id(0) == 0)
    def _init():
        acc_ref[...] = jnp.zeros_like(acc_ref)

    te = fr_ref.shape[0]
    e_base = pl.program_id(0) * te

    def body(j, carry):
        n = row_ref[e_base + j]
        cur = acc_ref[pl.ds(n, 1), :]
        acc_ref[pl.ds(n, 1), :] = cur + fr_ref[pl.ds(j, 1), :]
        return carry

    lax.fori_loop(0, te, body, 0)


def scatter_frames(row, fr_slab, num_nodes, *, max_edge_tile=512):
    """Scatter-add fr_slab [E, 28] onto nodes via row indices -> [num_nodes, 28]."""
    E = fr_slab.shape[0]
    te = min(max_edge_tile, _round_up(E, 8))
    E_pad = _round_up(E, te)
    fr_p = jnp.pad(fr_slab, ((0, E_pad - E), (0, 0)))          # padded edges: all-zero
    row_p = jnp.pad(row.astype(jnp.int32), (0, E_pad - E))     # padded rows -> node 0 (adds zeros)

    return pl.pallas_call(
        frame_scatter_kernel,
        out_shape=jax.ShapeDtypeStruct((num_nodes, 28), jnp.float32),
        grid_spec=pltpu.PrefetchScalarGridSpec(
            num_scalar_prefetch=1,
            grid=(E_pad // te,),
            in_specs=[pl.BlockSpec((te, 28), lambda i, row_r: (i, 0))],
            out_specs=pl.BlockSpec((num_nodes, 28), lambda i, row_r: (0, 0)),
        ),
        compiler_params=pltpu.CompilerParams(
            dimension_semantics=("arbitrary",),
            vmem_limit_bytes=VMEM_LIMIT_BYTES),
    )(row_p, fr_p)


# ---------------------------------------------------------------------------
# Kernel B: fused GCPLayerNorm + GCP for one branch, tiled over rows.
# ---------------------------------------------------------------------------
def make_gcp_kernel(use_silu: bool):
    def kernel(s_ref, v_ref, slab_ref, ln_g_ref, ln_b_ref, wd_ref, wdfr_ref,
               ws_ref, bs_ref, wu_ref, wg_ref, bg_ref, s_out_ref, v_out_ref):
        tm = s_ref.shape[0]
        s = s_ref[...]
        vx = v_ref[0]                       # [tm, Cv]  spatial x component
        vy = v_ref[1]
        vz = v_ref[2]

        # ---------- GCPLayerNorm (pre_norm=True) ----------
        mu = jnp.mean(s, axis=-1, keepdims=True)
        var = jnp.mean((s - mu) ** 2, axis=-1, keepdims=True)
        s_n = (s - mu) * lax.rsqrt(var + LN_EPS) * ln_g_ref[...] + ln_b_ref[...]

        sq = jnp.maximum(vx * vx + vy * vy + vz * vz, GCP_NORM_EPS)    # [tm, Cv]
        inv = lax.rsqrt(jnp.mean(sq, axis=-1, keepdims=True))          # [tm, 1]
        v_all = jnp.concatenate([vx * inv, vy * inv, vz * inv], axis=0)  # [3*tm, Cv]

        # ---------- GCP: batched spatial matmuls ----------
        vh = jnp.dot(v_all, wd_ref[...], preferred_element_type=jnp.float32)     # [3tm, H]
        dfr = jnp.dot(v_all, wdfr_ref[...], preferred_element_type=jnp.float32)  # [3tm, 9]

        vhx = vh[0:tm]
        vhy = vh[tm:2 * tm]
        vhz = vh[2 * tm:3 * tm]
        vnorm = jnp.sqrt(vhx * vhx + vhy * vhy + vhz * vhz + SAFE_NORM_EPS)       # [tm, H]

        # ---------- scalarize: 3 full-width FMAs against the frame slab ----------
        slab = slab_ref[...]                                                      # [tm, 28]
        cnt = jnp.maximum(slab[:, 27:28], 1.0)                                    # edge count (1 for edges)
        local = (dfr[0:tm] * slab[:, 0:9]
                 + dfr[tm:2 * tm] * slab[:, 9:18]
                 + dfr[2 * tm:3 * tm] * slab[:, 18:27]) / cnt                      # [tm, 9]

        merged = jnp.concatenate([s_n, vnorm, local], axis=-1)
        scal = jnp.dot(merged, ws_ref[...], preferred_element_type=jnp.float32) + bs_ref[...]

        # scalar_nonlinearity == vector_nonlinearity for both branches -> compute once
        act = jax.nn.silu(scal) if use_silu else scal
        gate = jax.nn.sigmoid(
            jnp.dot(act, wg_ref[...], preferred_element_type=jnp.float32) + bg_ref[...])

        vo = jnp.dot(vh, wu_ref[...], preferred_element_type=jnp.float32)         # [3tm, V_out]
        s_out_ref[...] = act
        v_out_ref[0] = vo[0:tm] * gate
        v_out_ref[1] = vo[tm:2 * tm] * gate
        v_out_ref[2] = vo[2 * tm:3 * tm] * gate

    return kernel


def gcp_branch(scalar, vec, slab, params, *, use_silu, max_row_tile=128):
    """One GCP branch (node or edge). scalar [M,Cs], vec [M,Cv,3], slab [M,28]."""
    M, Cs = scalar.shape
    Cv = vec.shape[1]
    S_out = params["ws"].shape[1]
    V_out = params["wu"].shape[1]

    tm = min(max_row_tile, _round_up(M, 8))
    M_pad = _round_up(M, tm)
    nb = M_pad // tm

    s_p = jnp.pad(scalar.astype(jnp.float32), ((0, M_pad - M), (0, 0)))
    v3 = jnp.transpose(vec.astype(jnp.float32), (2, 0, 1))                # [3, M, Cv]
    v3_p = jnp.pad(v3, ((0, 0), (0, M_pad - M), (0, 0)))
    slab_p = jnp.pad(slab.astype(jnp.float32), ((0, M_pad - M), (0, 0)))

    # vector_down_frames weight with each output column repeated 3x so that
    # (v @ wdf_rep) lands in the [., 3a+b] lane layout of the frame slabs.
    wdf_rep = jnp.broadcast_to(params["wdf"][:, :, None], (Cv, 3, 3)).reshape(Cv, 9)

    weights = [params["ln_g"], params["ln_b"], params["wd"], wdf_rep,
               params["ws"], params["bs"], params["wu"], params["wg"], params["bg"]]

    def resident(arr):
        nd = arr.ndim
        return pl.BlockSpec(arr.shape, lambda i, _nd=nd: (0,) * _nd)

    in_specs = ([pl.BlockSpec((tm, Cs), lambda i: (i, 0)),
                 pl.BlockSpec((3, tm, Cv), lambda i: (0, i, 0)),
                 pl.BlockSpec((tm, 28), lambda i: (i, 0))]
                + [resident(w) for w in weights])
    out_specs = (pl.BlockSpec((tm, S_out), lambda i: (i, 0)),
                 pl.BlockSpec((3, tm, V_out), lambda i: (0, i, 0)))
    out_shape = (jax.ShapeDtypeStruct((M_pad, S_out), jnp.float32),
                 jax.ShapeDtypeStruct((3, M_pad, V_out), jnp.float32))

    s_o, v3_o = pl.pallas_call(
        make_gcp_kernel(use_silu),
        out_shape=out_shape,
        grid=(nb,),
        in_specs=in_specs,
        out_specs=out_specs,
        compiler_params=pltpu.CompilerParams(
            dimension_semantics=("parallel",),
            vmem_limit_bytes=VMEM_LIMIT_BYTES),
    )(s_p, v3_p, slab_p, *weights)

    s_o = s_o[:M]
    v_o = jnp.transpose(v3_o[:, :M, :], (1, 2, 0))                         # [M, V_out, 3]
    return s_o, v_o


@jax.jit
def gcp_embedding_forward(h, chi, e, xi, edge_index, f_ij, node_params, edge_params):
    """GCPEmbedding.forward (num_atom_types=0, pre_norm=True, no node_mask)."""
    N = h.shape[0]
    E = f_ij.shape[0]
    row = edge_index[0].astype(jnp.int32)

    # Frame slab [E, 28]: lane 9*s + 3*a + b = frames[e, b, s]; lane 27 = 1.0 (count).
    fr_sb = jnp.transpose(f_ij.astype(jnp.float32), (0, 2, 1))             # [E, s, b]
    fr27 = jnp.broadcast_to(fr_sb[:, :, None, :], (E, 3, 3, 3)).reshape(E, 27)
    fr_slab = jnp.concatenate([fr27, jnp.ones((E, 1), jnp.float32)], axis=-1)

    # Edge branch: nonlinearities = ('silu', 'silu'); frames used per-edge directly.
    edge_s, edge_v = gcp_branch(e, xi, fr_slab, edge_params, use_silu=True)

    # Node branch: nonlinearities = ('none', 'none'); scatter-mean of frames onto
    # nodes (index-driven, no gather needed since df[row[e]] factors out of the mean).
    node_slab = scatter_frames(row, fr_slab, N)
    node_s, node_v = gcp_branch(h, chi, node_slab, node_params, use_silu=False)

    return (node_s, node_v), (edge_s, edge_v)


# ----------------------- pure-JAX reference (original semantics) -----------------------
def _ref_branch(scalar, vec, frames, row, p, node_inputs, use_silu):
    mu = scalar.mean(-1, keepdims=True)
    var = ((scalar - mu) ** 2).mean(-1, keepdims=True)
    s_n = (scalar - mu) / jnp.sqrt(var + LN_EPS) * p["ln_g"] + p["ln_b"]
    vn = jnp.clip(jnp.sum(vec ** 2, -1, keepdims=True), GCP_NORM_EPS)
    vn = jnp.sqrt(jnp.mean(vn, -2, keepdims=True))
    v = vec / vn
    v_pre = jnp.swapaxes(v, -1, -2)                        # [M, 3, C_in]
    vh = v_pre @ p["wd"]                                   # [M, 3, hidden]
    vnorm = jnp.sqrt(jnp.sum(vh ** 2, -2) + SAFE_NORM_EPS)
    vdf = v_pre @ p["wdf"]                                 # [M, 3, 3]
    vi = vdf[row] if node_inputs else vdf
    local = jnp.swapaxes(jnp.einsum("eij,ejk->eik", frames, vi), -1, -2).reshape(-1, 9)
    if node_inputs:
        N = scalar.shape[0]
        summed = jnp.zeros((N, 9), jnp.float32).at[row].add(local)
        counts = jnp.zeros((N, 1), jnp.float32).at[row].add(1.0)
        local = summed / jnp.maximum(counts, 1.0)
    merged = jnp.concatenate([s_n, vnorm, local], -1)
    scal = merged @ p["ws"] + p["bs"]
    vo = jnp.swapaxes(vh @ p["wu"], -1, -2)                # [M, v_out, 3]
    act = jax.nn.silu(scal) if use_silu else scal
    gate = jax.nn.sigmoid(act @ p["wg"] + p["bg"])
    vo = vo * gate[..., None]
    s_final = jax.nn.silu(scal) if use_silu else scal
    return s_final, vo


def _ref_forward(h, chi, e, xi, edge_index, f_ij, node_p, edge_p):
    row = edge_index[0]
    er = _ref_branch(e, xi, f_ij, row, edge_p, node_inputs=False, use_silu=True)
    nr = _ref_branch(h, chi, f_ij, row, node_p, node_inputs=True, use_silu=False)
    return nr, er


def init_params(key, s_in, v_in, s_out, v_out):
    hidden = max(v_in, v_out)   # bottleneck = 1
    ks = jax.random.split(key, 9)
    f32 = jnp.float32
    return {
        "ln_g": (1.0 + 0.1 * jax.random.normal(ks[0], (1, s_in))).astype(f32),
        "ln_b": (0.1 * jax.random.normal(ks[1], (1, s_in))).astype(f32),
        "wd":   (0.2 * jax.random.normal(ks[2], (v_in, hidden))).astype(f32),
        "wdf":  (0.2 * jax.random.normal(ks[3], (v_in, 3))).astype(f32),
        "ws":   (0.2 * jax.random.normal(ks[4], (s_in + hidden + 9, s_out))).astype(f32),
        "bs":   (0.1 * jax.random.normal(ks[5], (1, s_out))).astype(f32),
        "wu":   (0.2 * jax.random.normal(ks[6], (hidden, v_out))).astype(f32),
        "wg":   (0.2 * jax.random.normal(ks[7], (s_out, v_out))).astype(f32),
        "bg":   (0.1 * jax.random.normal(ks[8], (1, v_out))).astype(f32),
    }


if __name__ == "__main__":
    key = jax.random.PRNGKey(0)
    N, E = 8, 16
    h_in, chi_in = 16, 4        # node_input_dims  (scalar, vector)
    e_in, xi_in = 8, 2          # edge_input_dims
    h_hid, chi_hid = 32, 8      # node_hidden_dims
    e_hid, xi_hid = 16, 4       # edge_hidden_dims

    keys = jax.random.split(key, 8)
    h = jax.random.normal(keys[0], (N, h_in), jnp.float32)
    chi = jax.random.normal(keys[1], (N, chi_in, 3), jnp.float32)
    e = jax.random.normal(keys[2], (E, e_in), jnp.float32)
    xi = jax.random.normal(keys[3], (E, xi_in, 3), jnp.float32)
    f_ij = jax.random.normal(keys[4], (E, 3, 3), jnp.float32)
    edge_index = jax.random.randint(keys[5], (2, E), 0, N, jnp.int32)

    node_p = init_params(keys[6], h_in, chi_in, h_hid, chi_hid)
    edge_p = init_params(keys[7], e_in, xi_in, e_hid, xi_hid)

    (node_s, node_v), (edge_s, edge_v) = gcp_embedding_forward(
        h, chi, e, xi, edge_index, f_ij, node_p, edge_p)
    jax.block_until_ready((node_s, node_v, edge_s, edge_v))

    # sanity check against a pure-JAX reference of the original (gather/scatter) math
    (rn_s, rn_v), (re_s, re_v) = _ref_forward(h, chi, e, xi, edge_index, f_ij, node_p, edge_p)
    assert node_s.shape == (N, h_hid) and node_v.shape == (N, chi_hid, 3)
    assert edge_s.shape == (E, e_hid) and edge_v.shape == (E, xi_hid, 3)
    np.testing.assert_allclose(np.asarray(node_s), np.asarray(rn_s), atol=1e-4, rtol=1e-4)
    np.testing.assert_allclose(np.asarray(node_v), np.asarray(rn_v), atol=1e-4, rtol=1e-4)
    np.testing.assert_allclose(np.asarray(edge_s), np.asarray(re_s), atol=1e-4, rtol=1e-4)
    np.testing.assert_allclose(np.asarray(edge_v), np.asarray(re_v), atol=1e-4, rtol=1e-4)

    print("KERNEL_OK")
</pallas_src>

<mosaic_0001>
module attributes {stable_mosaic.version = 11 : i64} {
  func.func @frame_scatter_kernel(%arg0: i32, %arg1: memref<16xi32, #tpu.memory_space<smem>>, %arg2: memref<16x28xf32, #tpu.memory_space<vmem>>, %arg3: memref<8x28xf32, #tpu.memory_space<vmem>>) attributes {dimension_semantics = [#tpu.dimension_semantics<arbitrary>], iteration_bounds = array<i64: 1>, scalar_prefetch = 1 : i64, scratch_operands = 0 : i64, tpu.core_type = #tpu.core_type<tc>, window_params = [{transform_indices = @transform_0, window_bounds = array<i64: 16, 28>}, {pipeline_mode = #tpu.pipeline_mode<synchronous>, transform_indices = @transform_1, window_bounds = array<i64: 8, 28>}]} {
    %c0_i32 = arith.constant 0 : i32
    %0 = arith.cmpi eq, %arg0, %c0_i32 : i32
    %1 = arith.extui %0 : i1 to i32
    %c0_i32_0 = arith.constant 0 : i32
    %2 = arith.cmpi ne, %1, %c0_i32_0 : i32
    scf.if %2 {
      %cst = arith.constant 0.000000e+00 : f32
      %5 = vector.broadcast %cst : f32 to vector<8x28xf32>
      %c0 = arith.constant 0 : index
      %c0_4 = arith.constant 0 : index
      %6 = vector.load %arg3[%c0, %c0_4] : memref<8x28xf32, #tpu.memory_space<vmem>>, vector<8x28xf32>
      tpu.vector_store %arg3[%c0, %c0_4], %5 {strides = array<i32>} : memref<8x28xf32, #tpu.memory_space<vmem>>, vector<8x28xf32>,
    } else {
    }
    %c16_i32 = arith.constant 16 : i32
    %3 = arith.muli %arg0, %c16_i32 : i32
    %c0_i32_1 = arith.constant 0 : i32
    %c16_i32_2 = arith.constant 16 : i32
    %4 = arith.addi %c0_i32_1, %c16_i32_2 : i32
    %c1_i32 = arith.constant 1 : i32
    scf.for %arg4 = %c0_i32_1 to %4 step %c1_i32  : i32 {
      %5 = arith.addi %3, %arg4 : i32
      %6 = arith.index_cast %5 : i32 to index
      %7 = memref.load %arg1[%6] : memref<16xi32, #tpu.memory_space<smem>>
      %8 = arith.index_cast %7 : i32 to index
      %c0 = arith.constant 0 : index
      %9 = vector.load %arg3[%8, %c0] : memref<8x28xf32, #tpu.memory_space<vmem>>, vector<1x28xf32>
      %10 = arith.index_cast %arg4 : i32 to index
      %c0_4 = arith.constant 0 : index
      %11 = vector.load %arg2[%10, %c0_4] : memref<16x28xf32, #tpu.memory_space<vmem>>, vector<1x28xf32>
      %12 = arith.addf %9, %11 : vector<1x28xf32>
      %13 = arith.index_cast %7 : i32 to index
      %c0_5 = arith.constant 0 : index
      %14 = vector.load %arg3[%13, %c0_5] : memref<8x28xf32, #tpu.memory_space<vmem>>, vector<1x28xf32>
      tpu.vector_store %arg3[%13, %c0_5], %12 {strides = array<i32>} : memref<8x28xf32, #tpu.memory_space<vmem>>, vector<1x28xf32>,
    }
    %c16_i32_3 = arith.constant 16 : i32
    return
  }
  func.func @transform_0(%arg0: i32, %arg1: memref<16xi32, #tpu.memory_space<smem>>) -> (i32, i32) {
    %c0_i32 = arith.constant 0 : i32
    %c0_i32_0 = arith.constant 0 : i32
    return %arg0, %c0_i32 : i32, i32
  }
  func.func @transform_1(%arg0: i32, %arg1: memref<16xi32, #tpu.memory_space<smem>>) -> (i32, i32) {
    %c0_i32 = arith.constant 0 : i32
    %c0_i32_0 = arith.constant 0 : i32
    %c0_i32_1 = arith.constant 0 : i32
    return %c0_i32, %c0_i32_0 : i32, i32
  }
}

module attributes {stable_mosaic.version = 11 : i64} {
  func.func @kernel(%arg0: i32, %arg1: memref<16x8xf32, #tpu.memory_space<vmem>>, %arg2: memref<3x16x2xf32, #tpu.memory_space<vmem>>, %arg3: memref<16x28xf32, #tpu.memory_space<vmem>>, %arg4: memref<1x8xf32, #tpu.memory_space<vmem>>, %arg5: memref<1x8xf32, #tpu.memory_space<vmem>>, %arg6: memref<2x4xf32, #tpu.memory_space<vmem>>, %arg7: memref<2x9xf32, #tpu.memory_space<vmem>>, %arg8: memref<21x16xf32, #tpu.memory_space<vmem>>, %arg9: memref<1x16xf32, #tpu.memory_space<vmem>>, %arg10: memref<4x4xf32, #tpu.memory_space<vmem>>, %arg11: memref<16x4xf32, #tpu.memory_space<vmem>>, %arg12: memref<1x4xf32, #tpu.memory_space<vmem>>, %arg13: memref<16x16xf32, #tpu.memory_space<vmem>>, %arg14: memref<3x16x4xf32, #tpu.memory_space<vmem>>) attributes {dimension_semantics = [#tpu.dimension_semantics<parallel>], iteration_bounds = array<i64: 1>, scalar_prefetch = 0 : i64, scratch_operands = 0 : i64, tpu.core_type = #tpu.core_type<tc>, window_params = [{transform_indices = @transform_0, window_bounds = array<i64: 16, 8>}, {transform_indices = @transform_1, window_bounds = array<i64: 3, 16, 2>}, {transform_indices = @transform_2, window_bounds = array<i64: 16, 28>}, {pipeline_mode = #tpu.pipeline_mode<synchronous>, transform_indices = @transform_3, window_bounds = array<i64: 1, 8>}, {pipeline_mode = #tpu.pipeline_mode<synchronous>, transform_indices = @transform_4, window_bounds = array<i64: 1, 8>}, {pipeline_mode = #tpu.pipeline_mode<synchronous>, transform_indices = @transform_5, window_bounds = array<i64: 2, 4>}, {pipeline_mode = #tpu.pipeline_mode<synchronous>, transform_indices = @transform_6, window_bounds = array<i64: 2, 9>}, {pipeline_mode = #tpu.pipeline_mode<synchronous>, transform_indices = @transform_7, window_bounds = array<i64: 21, 16>}, {pipeline_mode = #tpu.pipeline_mode<synchronous>, transform_indices = @transform_8, window_bounds = array<i64: 1, 16>}, {pipeline_mode = #tpu.pipeline_mode<synchronous>, transform_indices = @transform_9, window_bounds = array<i64: 4, 4>}, {pipeline_mode = #tpu.pipeline_mode<synchronous>, transform_indices = @transform_10, window_bounds = array<i64: 16, 4>}, {pipeline_mode = #tpu.pipeline_mode<synchronous>, transform_indices = @transform_11, window_bounds = array<i64: 1, 4>}, {transform_indices = @transform_12, window_bounds = array<i64: 16, 16>}, {transform_indices = @transform_13, window_bounds = array<i64: 3, 16, 4>}]} {
    %c0 = arith.constant 0 : index
    %c0_0 = arith.constant 0 : index
    %0 = vector.load %arg1[%c0, %c0_0] : memref<16x8xf32, #tpu.memory_space<vmem>>, vector<16x8xf32>
    %c0_1 = arith.constant 0 : index
    %c0_2 = arith.constant 0 : index
    %c0_3 = arith.constant 0 : index
    %1 = vector.load %arg2[%c0_1, %c0_2, %c0_3] : memref<3x16x2xf32, #tpu.memory_space<vmem>>, vector<1x16x2xf32>
    %2 = vector.shape_cast %1 : vector<1x16x2xf32> to vector<16x2xf32>
    %c1 = arith.constant 1 : index
    %c0_4 = arith.constant 0 : index
    %c0_5 = arith.constant 0 : index
    %3 = vector.load %arg2[%c1, %c0_4, %c0_5] : memref<3x16x2xf32, #tpu.memory_space<vmem>>, vector<1x16x2xf32>
    %4 = vector.shape_cast %3 : vector<1x16x2xf32> to vector<16x2xf32>
    %c2 = arith.constant 2 : index
    %c0_6 = arith.constant 0 : index
    %c0_7 = arith.constant 0 : index
    %5 = vector.load %arg2[%c2, %c0_6, %c0_7] : memref<3x16x2xf32, #tpu.memory_space<vmem>>, vector<1x16x2xf32>
    %6 = vector.shape_cast %5 : vector<1x16x2xf32> to vector<16x2xf32>
    %cst = arith.constant dense<0.000000e+00> : vector<16xf32>
    %7 = vector.multi_reduction <add>, %0, %cst [1] : vector<16x8xf32> to vector<16xf32>
    %8 = vector.shape_cast %7 : vector<16xf32> to vector<16x1xf32>
    %cst_8 = arith.constant 8.000000e+00 : f32
    %9 = vector.broadcast %cst_8 : f32 to vector<16x1xf32>
    %10 = arith.divf %8, %9 : vector<16x1xf32>
    %11 = vector.broadcast %10 : vector<16x1xf32> to vector<16x8xf32>
    %12 = arith.subf %0, %11 : vector<16x8xf32>
    %13 = arith.mulf %12, %12 : vector<16x8xf32>
    %cst_9 = arith.constant dense<0.000000e+00> : vector<16xf32>
    %14 = vector.multi_reduction <add>, %13, %cst_9 [1] : vector<16x8xf32> to vector<16xf32>
    %15 = vector.shape_cast %14 : vector<16xf32> to vector<16x1xf32>
    %cst_10 = arith.constant 8.000000e+00 : f32
    %16 = vector.broadcast %cst_10 : f32 to vector<16x1xf32>
    %17 = arith.divf %15, %16 : vector<16x1xf32>
    %18 = vector.broadcast %10 : vector<16x1xf32> to vector<16x8xf32>
    %19 = arith.subf %0, %18 : vector<16x8xf32>
    %cst_11 = arith.constant 9.99999974E-6 : f32
    %20 = vector.broadcast %cst_11 : f32 to vector<16x1xf32>
    %21 = arith.addf %17, %20 : vector<16x1xf32>
    %22 = math.rsqrt %21 : vector<16x1xf32>
    %23 = vector.broadcast %22 : vector<16x1xf32> to vector<16x8xf32>
    %24 = arith.mulf %19, %23 : vector<16x8xf32>
    %c0_12 = arith.constant 0 : index
    %c0_13 = arith.constant 0 : index
    %25 = vector.load %arg4[%c0_12, %c0_13] : memref<1x8xf32, #tpu.memory_space<vmem>>, vector<1x8xf32>
    %26 = vector.broadcast %25 : vector<1x8xf32> to vector<16x8xf32>
    %27 = arith.mulf %24, %26 : vector<16x8xf32>
    %c0_14 = arith.constant 0 : index
    %c0_15 = arith.constant 0 : index
    %28 = vector.load %arg5[%c0_14, %c0_15] : memref<1x8xf32, #tpu.memory_space<vmem>>, vector<1x8xf32>
    %29 = vector.broadcast %28 : vector<1x8xf32> to vector<16x8xf32>
    %30 = arith.addf %27, %29 : vector<16x8xf32>
    %31 = arith.mulf %2, %2 : vector<16x2xf32>
    %32 = arith.mulf %4, %4 : vector<16x2xf32>
    %33 = arith.addf %31, %32 : vector<16x2xf32>
    %34 = arith.mulf %6, %6 : vector<16x2xf32>
    %35 = arith.addf %33, %34 : vector<16x2xf32>
    %cst_16 = arith.constant 9.99999993E-9 : f32
    %36 = vector.broadcast %cst_16 : f32 to vector<16x2xf32>
    %37 = arith.maximumf %35, %36 : vector<16x2xf32>
    %cst_17 = arith.constant dense<0.000000e+00> : vector<16xf32>
    %38 = vector.multi_reduction <add>, %37, %cst_17 [1] : vector<16x2xf32> to vector<16xf32>
    %39 = vector.shape_cast %38 : vector<16xf32> to vector<16x1xf32>
    %cst_18 = arith.constant 2.000000e+00 : f32
    %40 = vector.broadcast %cst_18 : f32 to vector<16x1xf32>
    %41 = arith.divf %39, %40 : vector<16x1xf32>
    %42 = math.rsqrt %41 : vector<16x1xf32>
    %43 = vector.broadcast %42 : vector<16x1xf32> to vector<16x2xf32>
    %44 = arith.mulf %2, %43 : vector<16x2xf32>
    %45 = vector.broadcast %42 : vector<16x1xf32> to vector<16x2xf32>
    %46 = arith.mulf %4, %45 : vector<16x2xf32>
    %47 = vector.broadcast %42 : vector<16x1xf32> to vector<16x2xf32>
    %48 = arith.mulf %6, %47 : vector<16x2xf32>
    %49 = tpu.concatenate %44, %46, %48 in 0 : vector<16x2xf32>, vector<16x2xf32>, vector<16x2xf32> -> vector<48x2xf32>
    %c0_19 = arith.constant 0 : index
    %c0_20 = arith.constant 0 : index
    %50 = vector.load %arg6[%c0_19, %c0_20] : memref<2x4xf32, #tpu.memory_space<vmem>>, vector<2x4xf32>
    %cst_21 = arith.constant dense<0.000000e+00> : vector<48x4xf32>
    %51 = tpu.matmul %49, %50, %cst_21 {dimension_numbers = #tpu.dot_dimension_numbers<[1], [0], [0], [1], [0, 0, 1, 1], [], []>} : vector<48x2xf32>, vector<2x4xf32>, vector<48x4xf32> -> vector<48x4xf32>
    %c0_22 = arith.constant 0 : index
    %c0_23 = arith.constant 0 : index
    %52 = vector.load %arg7[%c0_22, %c0_23] : memref<2x9xf32, #tpu.memory_space<vmem>>, vector<2x9xf32>
    %cst_24 = arith.constant dense<0.000000e+00> : vector<48x9xf32>
    %53 = tpu.matmul %49, %52, %cst_24 {dimension_numbers = #tpu.dot_dimension_numbers<[1], [0], [0], [1], [0, 0, 1, 1], [], []>} : vector<48x2xf32>, vector<2x9xf32>, vector<48x9xf32> -> vector<48x9xf32>
    %54 = vector.extract_strided_slice %51 {offsets = [0, 0], sizes = [16, 4], strides = [1, 1]} : vector<48x4xf32> to vector<16x4xf32>
    %55 = vector.extract_strided_slice %51 {offsets = [16, 0], sizes = [16, 4], strides = [1, 1]} : vector<48x4xf32> to vector<16x4xf32>
    %56 = vector.extract_strided_slice %51 {offsets = [32, 0], sizes = [16, 4], strides = [1, 1]} : vector<48x4xf32> to vector<16x4xf32>
    %57 = arith.mulf %54, %54 : vector<16x4xf32>
    %58 = arith.mulf %55, %55 : vector<16x4xf32>
    %59 = arith.addf %57, %58 : vector<16x4xf32>
    %60 = arith.mulf %56, %56 : vector<16x4xf32>
    %61 = arith.addf %59, %60 : vector<16x4xf32>
    %cst_25 = arith.constant 9.99999993E-9 : f32
    %62 = vector.broadcast %cst_25 : f32 to vector<16x4xf32>
    %63 = arith.addf %61, %62 : vector<16x4xf32>
    %64 = math.sqrt %63 : vector<16x4xf32>
    %c0_26 = arith.constant 0 : index
    %c0_27 = arith.constant 0 : index
    %65 = vector.load %arg3[%c0_26, %c0_27] : memref<16x28xf32, #tpu.memory_space<vmem>>, vector<16x28xf32>
    %66 = vector.extract_strided_slice %65 {offsets = [0, 27], sizes = [16, 1], strides = [1, 1]} : vector<16x28xf32> to vector<16x1xf32>
    %cst_28 = arith.constant 1.000000e+00 : f32
    %67 = vector.broadcast %cst_28 : f32 to vector<16x1xf32>
    %68 = arith.maximumf %66, %67 : vector<16x1xf32>
    %69 = vector.extract_strided_slice %53 {offsets = [0, 0], sizes = [16, 9], strides = [1, 1]} : vector<48x9xf32> to vector<16x9xf32>
    %70 = vector.extract_strided_slice %65 {offsets = [0, 0], sizes = [16, 9], strides = [1, 1]} : vector<16x28xf32> to vector<16x9xf32>
    %71 = arith.mulf %69, %70 : vector<16x9xf32>
    %72 = vector.extract_strided_slice %53 {offsets = [16, 0], sizes = [16, 9], strides = [1, 1]} : vector<48x9xf32> to vector<16x9xf32>
    %73 = vector.extract_strided_slice %65 {offsets = [0, 9], sizes = [16, 9], strides = [1, 1]} : vector<16x28xf32> to vector<16x9xf32>
    %74 = arith.mulf %72, %73 : vector<16x9xf32>
    %75 = arith.addf %71, %74 : vector<16x9xf32>
    %76 = vector.extract_strided_slice %53 {offsets = [32, 0], sizes = [16, 9], strides = [1, 1]} : vector<48x9xf32> to vector<16x9xf32>
    %77 = vector.extract_strided_slice %65 {offsets = [0, 18], sizes = [16, 9], strides = [1, 1]} : vector<16x28xf32> to vector<16x9xf32>
    %78 = arith.mulf %76, %77 : vector<16x9xf32>
    %79 = arith.addf %75, %78 : vector<16x9xf32>
    %80 = vector.broadcast %68 : vector<16x1xf32> to vector<16x9xf32>
    %81 = arith.divf %79, %80 : vector<16x9xf32>
    %82 = tpu.concatenate %30, %64, %81 in 1 : vector<16x8xf32>, vector<16x4xf32>, vector<16x9xf32> -> vector<16x21xf32>
    %c0_29 = arith.constant 0 : index
    %c0_30 = arith.constant 0 : index
    %83 = vector.load %arg8[%c0_29, %c0_30] : memref<21x16xf32, #tpu.memory_space<vmem>>, vector<21x16xf32>
    %cst_31 = arith.constant dense<0.000000e+00> : vector<16x16xf32>
    %84 = tpu.matmul %82, %83, %cst_31 {dimension_numbers = #tpu.dot_dimension_numbers<[1], [0], [0], [1], [0, 0, 1, 1], [], []>} : vector<16x21xf32>, vector<21x16xf32>, vector<16x16xf32> -> vector<16x16xf32>
    %c0_32 = arith.constant 0 : index
    %c0_33 = arith.constant 0 : index
    %85 = vector.load %arg9[%c0_32, %c0_33] : memref<1x16xf32, #tpu.memory_space<vmem>>, vector<1x16xf32>
    %86 = vector.broadcast %85 : vector<1x16xf32> to vector<16x16xf32>
    %87 = arith.addf %84, %86 : vector<16x16xf32>
    %88 = arith.negf %87 : vector<16x16xf32>
    %89 = math.exp %88 : vector<16x16xf32>
    %cst_34 = arith.constant 1.000000e+00 : f32
    %90 = vector.broadcast %cst_34 : f32 to vector<16x16xf32>
    %91 = arith.addf %90, %89 : vector<16x16xf32>
    %92 = arith.divf %90, %91 : vector<16x16xf32>
    %93 = arith.mulf %87, %92 : vector<16x16xf32>
    %c0_35 = arith.constant 0 : index
    %c0_36 = arith.constant 0 : index
    %94 = vector.load %arg11[%c0_35, %c0_36] : memref<16x4xf32, #tpu.memory_space<vmem>>, vector<16x4xf32>
    %cst_37 = arith.constant dense<0.000000e+00> : vector<16x4xf32>
    %95 = tpu.matmul %93, %94, %cst_37 {dimension_numbers = #tpu.dot_dimension_numbers<[1], [0], [0], [1], [0, 0, 1, 1], [], []>} : vector<16x16xf32>, vector<16x4xf32>, vector<16x4xf32> -> vector<16x4xf32>
    %c0_38 = arith.constant 0 : index
    %c0_39 = arith.constant 0 : index
    %96 = vector.load %arg12[%c0_38, %c0_39] : memref<1x4xf32, #tpu.memory_space<vmem>>, vector<1x4xf32>
    %97 = vector.broadcast %96 : vector<1x4xf32> to vector<16x4xf32>
    %98 = arith.addf %95, %97 : vector<16x4xf32>
    %99 = arith.negf %98 : vector<16x4xf32>
    %100 = math.exp %99 : vector<16x4xf32>
    %cst_40 = arith.constant 1.000000e+00 : f32
    %101 = vector.broadcast %cst_40 : f32 to vector<16x4xf32>
    %102 = arith.addf %101, %100 : vector<16x4xf32>
    %103 = arith.divf %101, %102 : vector<16x4xf32>
    %c0_41 = arith.constant 0 : index
    %c0_42 = arith.constant 0 : index
    %104 = vector.load %arg10[%c0_41, %c0_42] : memref<4x4xf32, #tpu.memory_space<vmem>>, vector<4x4xf32>
    %cst_43 = arith.constant dense<0.000000e+00> : vector<48x4xf32>
    %105 = tpu.matmul %51, %104, %cst_43 {dimension_numbers = #tpu.dot_dimension_numbers<[1], [0], [0], [1], [0, 0, 1, 1], [], []>} : vector<48x4xf32>, vector<4x4xf32>, vector<48x4xf32> -> vector<48x4xf32>
    %c0_44 = arith.constant 0 : index
    %c0_45 = arith.constant 0 : index
    %106 = vector.load %arg13[%c0_44, %c0_45] : memref<16x16xf32, #tpu.memory_space<vmem>>, vector<16x16xf32>
    tpu.vector_store %arg13[%c0_44, %c0_45], %93 {strides = array<i32>} : memref<16x16xf32, #tpu.memory_space<vmem>>, vector<16x16xf32>,
    %107 = vector.extract_strided_slice %105 {offsets = [0, 0], sizes = [16, 4], strides = [1, 1]} : vector<48x4xf32> to vector<16x4xf32>
    %108 = arith.mulf %107, %103 : vector<16x4xf32>
    %c0_46 = arith.constant 0 : index
    %c0_47 = arith.constant 0 : index
    %c0_48 = arith.constant 0 : index
    %109 = vector.load %arg14[%c0_46, %c0_47, %c0_48] : memref<3x16x4xf32, #tpu.memory_space<vmem>>, vector<1x16x4xf32>
    %110 = vector.shape_cast %109 : vector<1x16x4xf32> to vector<16x4xf32>
    %111 = vector.shape_cast %108 : vector<16x4xf32> to vector<1x16x4xf32>
    tpu.vector_store %arg14[%c0_46, %c0_47, %c0_48], %111 {strides = array<i32>} : memref<3x16x4xf32, #tpu.memory_space<vmem>>, vector<1x16x4xf32>,
    %112 = vector.extract_strided_slice %105 {offsets = [16, 0], sizes = [16, 4], strides = [1, 1]} : vector<48x4xf32> to vector<16x4xf32>
    %113 = arith.mulf %112, %103 : vector<16x4xf32>
    %c1_49 = arith.constant 1 : index
    %c0_50 = arith.constant 0 : index
    %c0_51 = arith.constant 0 : index
    %114 = vector.load %arg14[%c1_49, %c0_50, %c0_51] : memref<3x16x4xf32, #tpu.memory_space<vmem>>, vector<1x16x4xf32>
    %115 = vector.shape_cast %114 : vector<1x16x4xf32> to vector<16x4xf32>
    %116 = vector.shape_cast %113 : vector<16x4xf32> to vector<1x16x4xf32>
    tpu.vector_store %arg14[%c1_49, %c0_50, %c0_51], %116 {strides = array<i32>} : memref<3x16x4xf32, #tpu.memory_space<vmem>>, vector<1x16x4xf32>,
    %117 = vector.extract_strided_slice %105 {offsets = [32, 0], sizes = [16, 4], strides = [1, 1]} : vector<48x4xf32> to vector<16x4xf32>
    %118 = arith.mulf %117, %103 : vector<16x4xf32>
    %c2_52 = arith.constant 2 : index
    %c0_53 = arith.constant 0 : index
    %c0_54 = arith.constant 0 : index
    %119 = vector.load %arg14[%c2_52, %c0_53, %c0_54] : memref<3x16x4xf32, #tpu.memory_space<vmem>>, vector<1x16x4xf32>
    %120 = vector.shape_cast %119 : vector<1x16x4xf32> to vector<16x4xf32>
    %121 = vector.shape_cast %118 : vector<16x4xf32> to vector<1x16x4xf32>
    tpu.vector_store %arg14[%c2_52, %c0_53, %c0_54], %121 {strides = array<i32>} : memref<3x16x4xf32, #tpu.memory_space<vmem>>, vector<1x16x4xf32>,
    return
  }
  func.func @transform_0(%arg0: i32) -> (i32, i32) {
    %c0_i32 = arith.constant 0 : i32
    %c0_i32_0 = arith.constant 0 : i32
    return %arg0, %c0_i32 : i32, i32
  }
  func.func @transform_1(%arg0: i32) -> (i32, i32, i32) {
    %c0_i32 = arith.constant 0 : i32
    %c0_i32_0 = arith.constant 0 : i32
    %c0_i32_1 = arith.constant 0 : i32
    return %c0_i32, %arg0, %c0_i32_0 : i32, i32, i32
  }
  func.func @transform_2(%arg0: i32) -> (i32, i32) {
    %c0_i32 = arith.constant 0 : i32
    %c0_i32_0 = arith.constant 0 : i32
    return %arg0, %c0_i32 : i32, i32
  }
  func.func @transform_3(%arg0: i32) -> (i32, i32) {
    %c0_i32 = arith.constant 0 : i32
    %c0_i32_0 = arith.constant 0 : i32
    %c0_i32_1 = arith.constant 0 : i32
    return %c0_i32, %c0_i32_0 : i32, i32
  }
  func.func @transform_4(%arg0: i32) -> (i32, i32) {
    %c0_i32 = arith.constant 0 : i32
    %c0_i32_0 = arith.constant 0 : i32
    %c0_i32_1 = arith.constant 0 : i32
    return %c0_i32, %c0_i32_0 : i32, i32
  }
  func.func @transform_5(%arg0: i32) -> (i32, i32) {
    %c0_i32 = arith.constant 0 : i32
    %c0_i32_0 = arith.constant 0 : i32
    %c0_i32_1 = arith.constant 0 : i32
    return %c0_i32, %c0_i32_0 : i32, i32
  }
  func.func @transform_6(%arg0: i32) -> (i32, i32) {
    %c0_i32 = arith.constant 0 : i32
    %c0_i32_0 = arith.constant 0 : i32
    %c0_i32_1 = arith.constant 0 : i32
    return %c0_i32, %c0_i32_0 : i32, i32
  }
  func.func @transform_7(%arg0: i32) -> (i32, i32) {
    %c0_i32 = arith.constant 0 : i32
    %c0_i32_0 = arith.constant 0 : i32
    %c0_i32_1 = arith.constant 0 : i32
    return %c0_i32, %c0_i32_0 : i32, i32
  }
  func.func @transform_8(%arg0: i32) -> (i32, i32) {
    %c0_i32 = arith.constant 0 : i32
    %c0_i32_0 = arith.constant 0 : i32
    %c0_i32_1 = arith.constant 0 : i32
    return %c0_i32, %c0_i32_0 : i32, i32
  }
  func.func @transform_9(%arg0: i32) -> (i32, i32) {
    %c0_i32 = arith.constant 0 : i32
    %c0_i32_0 = arith.constant 0 : i32
    %c0_i32_1 = arith.constant 0 : i32
    return %c0_i32, %c0_i32_0 : i32, i32
  }
  func.func @transform_10(%arg0: i32) -> (i32, i32) {
    %c0_i32 = arith.constant 0 : i32
    %c0_i32_0 = arith.constant 0 : i32
    %c0_i32_1 = arith.constant 0 : i32
    return %c0_i32, %c0_i32_0 : i32, i32
  }
  func.func @transform_11(%arg0: i32) -> (i32, i32) {
    %c0_i32 = arith.constant 0 : i32
    %c0_i32_0 = arith.constant 0 : i32
    %c0_i32_1 = arith.constant 0 : i32
    return %c0_i32, %c0_i32_0 : i32, i32
  }
  func.func @transform_12(%arg0: i32) -> (i32, i32) {
    %c0_i32 = arith.constant 0 : i32
    %c0_i32_0 = arith.constant 0 : i32
    return %arg0, %c0_i32 : i32, i32
  }
  func.func @transform_13(%arg0: i32) -> (i32, i32, i32) {
    %c0_i32 = arith.constant 0 : i32
    %c0_i32_0 = arith.constant 0 : i32
    %c0_i32_1 = arith.constant 0 : i32
    return %c0_i32, %arg0, %c0_i32_0 : i32, i32, i32
  }
}

module attributes {stable_mosaic.version = 11 : i64} {
  func.func @kernel(%arg0: i32, %arg1: memref<8x16xf32, #tpu.memory_space<vmem>>, %arg2: memref<3x8x4xf32, #tpu.memory_space<vmem>>, %arg3: memref<8x28xf32, #tpu.memory_space<vmem>>, %arg4: memref<1x16xf32, #tpu.memory_space<vmem>>, %arg5: memref<1x16xf32, #tpu.memory_space<vmem>>, %arg6: memref<4x8xf32, #tpu.memory_space<vmem>>, %arg7: memref<4x9xf32, #tpu.memory_space<vmem>>, %arg8: memref<33x32xf32, #tpu.memory_space<vmem>>, %arg9: memref<1x32xf32, #tpu.memory_space<vmem>>, %arg10: memref<8x8xf32, #tpu.memory_space<vmem>>, %arg11: memref<32x8xf32, #tpu.memory_space<vmem>>, %arg12: memref<1x8xf32, #tpu.memory_space<vmem>>, %arg13: memref<8x32xf32, #tpu.memory_space<vmem>>, %arg14: memref<3x8x8xf32, #tpu.memory_space<vmem>>) attributes {dimension_semantics = [#tpu.dimension_semantics<parallel>], iteration_bounds = array<i64: 1>, scalar_prefetch = 0 : i64, scratch_operands = 0 : i64, tpu.core_type = #tpu.core_type<tc>, window_params = [{transform_indices = @transform_0, window_bounds = array<i64: 8, 16>}, {transform_indices = @transform_1, window_bounds = array<i64: 3, 8, 4>}, {transform_indices = @transform_2, window_bounds = array<i64: 8, 28>}, {pipeline_mode = #tpu.pipeline_mode<synchronous>, transform_indices = @transform_3, window_bounds = array<i64: 1, 16>}, {pipeline_mode = #tpu.pipeline_mode<synchronous>, transform_indices = @transform_4, window_bounds = array<i64: 1, 16>}, {pipeline_mode = #tpu.pipeline_mode<synchronous>, transform_indices = @transform_5, window_bounds = array<i64: 4, 8>}, {pipeline_mode = #tpu.pipeline_mode<synchronous>, transform_indices = @transform_6, window_bounds = array<i64: 4, 9>}, {pipeline_mode = #tpu.pipeline_mode<synchronous>, transform_indices = @transform_7, window_bounds = array<i64: 33, 32>}, {pipeline_mode = #tpu.pipeline_mode<synchronous>, transform_indices = @transform_8, window_bounds = array<i64: 1, 32>}, {pipeline_mode = #tpu.pipeline_mode<synchronous>, transform_indices = @transform_9, window_bounds = array<i64: 8, 8>}, {pipeline_mode = #tpu.pipeline_mode<synchronous>, transform_indices = @transform_10, window_bounds = array<i64: 32, 8>}, {pipeline_mode = #tpu.pipeline_mode<synchronous>, transform_indices = @transform_11, window_bounds = array<i64: 1, 8>}, {transform_indices = @transform_12, window_bounds = array<i64: 8, 32>}, {transform_indices = @transform_13, window_bounds = array<i64: 3, 8, 8>}]} {
    %c0 = arith.constant 0 : index
    %c0_0 = arith.constant 0 : index
    %0 = vector.load %arg1[%c0, %c0_0] : memref<8x16xf32, #tpu.memory_space<vmem>>, vector<8x16xf32>
    %c0_1 = arith.constant 0 : index
    %c0_2 = arith.constant 0 : index
    %c0_3 = arith.constant 0 : index
    %1 = vector.load %arg2[%c0_1, %c0_2, %c0_3] : memref<3x8x4xf32, #tpu.memory_space<vmem>>, vector<1x8x4xf32>
    %2 = vector.shape_cast %1 : vector<1x8x4xf32> to vector<8x4xf32>
    %c1 = arith.constant 1 : index
    %c0_4 = arith.constant 0 : index
    %c0_5 = arith.constant 0 : index
    %3 = vector.load %arg2[%c1, %c0_4, %c0_5] : memref<3x8x4xf32, #tpu.memory_space<vmem>>, vector<1x8x4xf32>
    %4 = vector.shape_cast %3 : vector<1x8x4xf32> to vector<8x4xf32>
    %c2 = arith.constant 2 : index
    %c0_6 = arith.constant 0 : index
    %c0_7 = arith.constant 0 : index
    %5 = vector.load %arg2[%c2, %c0_6, %c0_7] : memref<3x8x4xf32, #tpu.memory_space<vmem>>, vector<1x8x4xf32>
    %6 = vector.shape_cast %5 : vector<1x8x4xf32> to vector<8x4xf32>
    %cst = arith.constant dense<0.000000e+00> : vector<8xf32>
    %7 = vector.multi_reduction <add>, %0, %cst [1] : vector<8x16xf32> to vector<8xf32>
    %8 = vector.shape_cast %7 : vector<8xf32> to vector<8x1xf32>
    %cst_8 = arith.constant 1.600000e+01 : f32
    %9 = vector.broadcast %cst_8 : f32 to vector<8x1xf32>
    %10 = arith.divf %8, %9 : vector<8x1xf32>
    %11 = vector.broadcast %10 : vector<8x1xf32> to vector<8x16xf32>
    %12 = arith.subf %0, %11 : vector<8x16xf32>
    %13 = arith.mulf %12, %12 : vector<8x16xf32>
    %cst_9 = arith.constant dense<0.000000e+00> : vector<8xf32>
    %14 = vector.multi_reduction <add>, %13, %cst_9 [1] : vector<8x16xf32> to vector<8xf32>
    %15 = vector.shape_cast %14 : vector<8xf32> to vector<8x1xf32>
    %cst_10 = arith.constant 1.600000e+01 : f32
    %16 = vector.broadcast %cst_10 : f32 to vector<8x1xf32>
    %17 = arith.divf %15, %16 : vector<8x1xf32>
    %18 = vector.broadcast %10 : vector<8x1xf32> to vector<8x16xf32>
    %19 = arith.subf %0, %18 : vector<8x16xf32>
    %cst_11 = arith.constant 9.99999974E-6 : f32
    %20 = vector.broadcast %cst_11 : f32 to vector<8x1xf32>
    %21 = arith.addf %17, %20 : vector<8x1xf32>
    %22 = math.rsqrt %21 : vector<8x1xf32>
    %23 = vector.broadcast %22 : vector<8x1xf32> to vector<8x16xf32>
    %24 = arith.mulf %19, %23 : vector<8x16xf32>
    %c0_12 = arith.constant 0 : index
    %c0_13 = arith.constant 0 : index
    %25 = vector.load %arg4[%c0_12, %c0_13] : memref<1x16xf32, #tpu.memory_space<vmem>>, vector<1x16xf32>
    %26 = vector.broadcast %25 : vector<1x16xf32> to vector<8x16xf32>
    %27 = arith.mulf %24, %26 : vector<8x16xf32>
    %c0_14 = arith.constant 0 : index
    %c0_15 = arith.constant 0 : index
    %28 = vector.load %arg5[%c0_14, %c0_15] : memref<1x16xf32, #tpu.memory_space<vmem>>, vector<1x16xf32>
    %29 = vector.broadcast %28 : vector<1x16xf32> to vector<8x16xf32>
    %30 = arith.addf %27, %29 : vector<8x16xf32>
    %31 = arith.mulf %2, %2 : vector<8x4xf32>
    %32 = arith.mulf %4, %4 : vector<8x4xf32>
    %33 = arith.addf %31, %32 : vector<8x4xf32>
    %34 = arith.mulf %6, %6 : vector<8x4xf32>
    %35 = arith.addf %33, %34 : vector<8x4xf32>
    %cst_16 = arith.constant 9.99999993E-9 : f32
    %36 = vector.broadcast %cst_16 : f32 to vector<8x4xf32>
    %37 = arith.maximumf %35, %36 : vector<8x4xf32>
    %cst_17 = arith.constant dense<0.000000e+00> : vector<8xf32>
    %38 = vector.multi_reduction <add>, %37, %cst_17 [1] : vector<8x4xf32> to vector<8xf32>
    %39 = vector.shape_cast %38 : vector<8xf32> to vector<8x1xf32>
    %cst_18 = arith.constant 4.000000e+00 : f32
    %40 = vector.broadcast %cst_18 : f32 to vector<8x1xf32>
    %41 = arith.divf %39, %40 : vector<8x1xf32>
    %42 = math.rsqrt %41 : vector<8x1xf32>
    %43 = vector.broadcast %42 : vector<8x1xf32> to vector<8x4xf32>
    %44 = arith.mulf %2, %43 : vector<8x4xf32>
    %45 = vector.broadcast %42 : vector<8x1xf32> to vector<8x4xf32>
    %46 = arith.mulf %4, %45 : vector<8x4xf32>
    %47 = vector.broadcast %42 : vector<8x1xf32> to vector<8x4xf32>
    %48 = arith.mulf %6, %47 : vector<8x4xf32>
    %49 = tpu.concatenate %44, %46, %48 in 0 : vector<8x4xf32>, vector<8x4xf32>, vector<8x4xf32> -> vector<24x4xf32>
    %c0_19 = arith.constant 0 : index
    %c0_20 = arith.constant 0 : index
    %50 = vector.load %arg6[%c0_19, %c0_20] : memref<4x8xf32, #tpu.memory_space<vmem>>, vector<4x8xf32>
    %cst_21 = arith.constant dense<0.000000e+00> : vector<24x8xf32>
    %51 = tpu.matmul %49, %50, %cst_21 {dimension_numbers = #tpu.dot_dimension_numbers<[1], [0], [0], [1], [0, 0, 1, 1], [], []>} : vector<24x4xf32>, vector<4x8xf32>, vector<24x8xf32> -> vector<24x8xf32>
    %c0_22 = arith.constant 0 : index
    %c0_23 = arith.constant 0 : index
    %52 = vector.load %arg7[%c0_22, %c0_23] : memref<4x9xf32, #tpu.memory_space<vmem>>, vector<4x9xf32>
    %cst_24 = arith.constant dense<0.000000e+00> : vector<24x9xf32>
    %53 = tpu.matmul %49, %52, %cst_24 {dimension_numbers = #tpu.dot_dimension_numbers<[1], [0], [0], [1], [0, 0, 1, 1], [], []>} : vector<24x4xf32>, vector<4x9xf32>, vector<24x9xf32> -> vector<24x9xf32>
    %54 = vector.extract_strided_slice %51 {offsets = [0, 0], sizes = [8, 8], strides = [1, 1]} : vector<24x8xf32> to vector<8x8xf32>
    %55 = vector.extract_strided_slice %51 {offsets = [8, 0], sizes = [8, 8], strides = [1, 1]} : vector<24x8xf32> to vector<8x8xf32>
    %56 = vector.extract_strided_slice %51 {offsets = [16, 0], sizes = [8, 8], strides = [1, 1]} : vector<24x8xf32> to vector<8x8xf32>
    %57 = arith.mulf %54, %54 : vector<8x8xf32>
    %58 = arith.mulf %55, %55 : vector<8x8xf32>
    %59 = arith.addf %57, %58 : vector<8x8xf32>
    %60 = arith.mulf %56, %56 : vector<8x8xf32>
    %61 = arith.addf %59, %60 : vector<8x8xf32>
    %cst_25 = arith.constant 9.99999993E-9 : f32
    %62 = vector.broadcast %cst_25 : f32 to vector<8x8xf32>
    %63 = arith.addf %61, %62 : vector<8x8xf32>
    %64 = math.sqrt %63 : vector<8x8xf32>
    %c0_26 = arith.constant 0 : index
    %c0_27 = arith.constant 0 : index
    %65 = vector.load %arg3[%c0_26, %c0_27] : memref<8x28xf32, #tpu.memory_space<vmem>>, vector<8x28xf32>
    %66 = vector.extract_strided_slice %65 {offsets = [0, 27], sizes = [8, 1], strides = [1, 1]} : vector<8x28xf32> to vector<8x1xf32>
    %cst_28 = arith.constant 1.000000e+00 : f32
    %67 = vector.broadcast %cst_28 : f32 to vector<8x1xf32>
    %68 = arith.maximumf %66, %67 : vector<8x1xf32>
    %69 = vector.extract_strided_slice %53 {offsets = [0, 0], sizes = [8, 9], strides = [1, 1]} : vector<24x9xf32> to vector<8x9xf32>
    %70 = vector.extract_strided_slice %65 {offsets = [0, 0], sizes = [8, 9], strides = [1, 1]} : vector<8x28xf32> to vector<8x9xf32>
    %71 = arith.mulf %69, %70 : vector<8x9xf32>
    %72 = vector.extract_strided_slice %53 {offsets = [8, 0], sizes = [8, 9], strides = [1, 1]} : vector<24x9xf32> to vector<8x9xf32>
    %73 = vector.extract_strided_slice %65 {offsets = [0, 9], sizes = [8, 9], strides = [1, 1]} : vector<8x28xf32> to vector<8x9xf32>
    %74 = arith.mulf %72, %73 : vector<8x9xf32>
    %75 = arith.addf %71, %74 : vector<8x9xf32>
    %76 = vector.extract_strided_slice %53 {offsets = [16, 0], sizes = [8, 9], strides = [1, 1]} : vector<24x9xf32> to vector<8x9xf32>
    %77 = vector.extract_strided_slice %65 {offsets = [0, 18], sizes = [8, 9], strides = [1, 1]} : vector<8x28xf32> to vector<8x9xf32>
    %78 = arith.mulf %76, %77 : vector<8x9xf32>
    %79 = arith.addf %75, %78 : vector<8x9xf32>
    %80 = vector.broadcast %68 : vector<8x1xf32> to vector<8x9xf32>
    %81 = arith.divf %79, %80 : vector<8x9xf32>
    %82 = tpu.concatenate %30, %64, %81 in 1 : vector<8x16xf32>, vector<8x8xf32>, vector<8x9xf32> -> vector<8x33xf32>
    %c0_29 = arith.constant 0 : index
    %c0_30 = arith.constant 0 : index
    %83 = vector.load %arg8[%c0_29, %c0_30] : memref<33x32xf32, #tpu.memory_space<vmem>>, vector<33x32xf32>
    %cst_31 = arith.constant dense<0.000000e+00> : vector<8x32xf32>
    %84 = tpu.matmul %82, %83, %cst_31 {dimension_numbers = #tpu.dot_dimension_numbers<[1], [0], [0], [1], [0, 0, 1, 1], [], []>} : vector<8x33xf32>, vector<33x32xf32>, vector<8x32xf32> -> vector<8x32xf32>
    %c0_32 = arith.constant 0 : index
    %c0_33 = arith.constant 0 : index
    %85 = vector.load %arg9[%c0_32, %c0_33] : memref<1x32xf32, #tpu.memory_space<vmem>>, vector<1x32xf32>
    %86 = vector.broadcast %85 : vector<1x32xf32> to vector<8x32xf32>
    %87 = arith.addf %84, %86 : vector<8x32xf32>
    %c0_34 = arith.constant 0 : index
    %c0_35 = arith.constant 0 : index
    %88 = vector.load %arg11[%c0_34, %c0_35] : memref<32x8xf32, #tpu.memory_space<vmem>>, vector<32x8xf32>
    %cst_36 = arith.constant dense<0.000000e+00> : vector<8x8xf32>
    %89 = tpu.matmul %87, %88, %cst_36 {dimension_numbers = #tpu.dot_dimension_numbers<[1], [0], [0], [1], [0, 0, 1, 1], [], []>} : vector<8x32xf32>, vector<32x8xf32>, vector<8x8xf32> -> vector<8x8xf32>
    %c0_37 = arith.constant 0 : index
    %c0_38 = arith.constant 0 : index
    %90 = vector.load %arg12[%c0_37, %c0_38] : memref<1x8xf32, #tpu.memory_space<vmem>>, vector<1x8xf32>
    %91 = vector.broadcast %90 : vector<1x8xf32> to vector<8x8xf32>
    %92 = arith.addf %89, %91 : vector<8x8xf32>
    %93 = arith.negf %92 : vector<8x8xf32>
    %94 = math.exp %93 : vector<8x8xf32>
    %cst_39 = arith.constant 1.000000e+00 : f32
    %95 = vector.broadcast %cst_39 : f32 to vector<8x8xf32>
    %96 = arith.addf %95, %94 : vector<8x8xf32>
    %97 = arith.divf %95, %96 : vector<8x8xf32>
    %c0_40 = arith.constant 0 : index
    %c0_41 = arith.constant 0 : index
    %98 = vector.load %arg10[%c0_40, %c0_41] : memref<8x8xf32, #tpu.memory_space<vmem>>, vector<8x8xf32>
    %cst_42 = arith.constant dense<0.000000e+00> : vector<24x8xf32>
    %99 = tpu.matmul %51, %98, %cst_42 {dimension_numbers = #tpu.dot_dimension_numbers<[1], [0], [0], [1], [0, 0, 1, 1], [], []>} : vector<24x8xf32>, vector<8x8xf32>, vector<24x8xf32> -> vector<24x8xf32>
    %c0_43 = arith.constant 0 : index
    %c0_44 = arith.constant 0 : index
    %100 = vector.load %arg13[%c0_43, %c0_44] : memref<8x32xf32, #tpu.memory_space<vmem>>, vector<8x32xf32>
    tpu.vector_store %arg13[%c0_43, %c0_44], %87 {strides = array<i32>} : memref<8x32xf32, #tpu.memory_space<vmem>>, vector<8x32xf32>,
    %101 = vector.extract_strided_slice %99 {offsets = [0, 0], sizes = [8, 8], strides = [1, 1]} : vector<24x8xf32> to vector<8x8xf32>
    %102 = arith.mulf %101, %97 : vector<8x8xf32>
    %c0_45 = arith.constant 0 : index
    %c0_46 = arith.constant 0 : index
    %c0_47 = arith.constant 0 : index
    %103 = vector.load %arg14[%c0_45, %c0_46, %c0_47] : memref<3x8x8xf32, #tpu.memory_space<vmem>>, vector<1x8x8xf32>
    %104 = vector.shape_cast %103 : vector<1x8x8xf32> to vector<8x8xf32>
    %105 = vector.shape_cast %102 : vector<8x8xf32> to vector<1x8x8xf32>
    tpu.vector_store %arg14[%c0_45, %c0_46, %c0_47], %105 {strides = array<i32>} : memref<3x8x8xf32, #tpu.memory_space<vmem>>, vector<1x8x8xf32>,
    %106 = vector.extract_strided_slice %99 {offsets = [8, 0], sizes = [8, 8], strides = [1, 1]} : vector<24x8xf32> to vector<8x8xf32>
    %107 = arith.mulf %106, %97 : vector<8x8xf32>
    %c1_48 = arith.constant 1 : index
    %c0_49 = arith.constant 0 : index
    %c0_50 = arith.constant 0 : index
    %108 = vector.load %arg14[%c1_48, %c0_49, %c0_50] : memref<3x8x8xf32, #tpu.memory_space<vmem>>, vector<1x8x8xf32>
    %109 = vector.shape_cast %108 : vector<1x8x8xf32> to vector<8x8xf32>
    %110 = vector.shape_cast %107 : vector<8x8xf32> to vector<1x8x8xf32>
    tpu.vector_store %arg14[%c1_48, %c0_49, %c0_50], %110 {strides = array<i32>} : memref<3x8x8xf32, #tpu.memory_space<vmem>>, vector<1x8x8xf32>,
    %111 = vector.extract_strided_slice %99 {offsets = [16, 0], sizes = [8, 8], strides = [1, 1]} : vector<24x8xf32> to vector<8x8xf32>
    %112 = arith.mulf %111, %97 : vector<8x8xf32>
    %c2_51 = arith.constant 2 : index
    %c0_52 = arith.constant 0 : index
    %c0_53 = arith.constant 0 : index
    %113 = vector.load %arg14[%c2_51, %c0_52, %c0_53] : memref<3x8x8xf32, #tpu.memory_space<vmem>>, vector<1x8x8xf32>
    %114 = vector.shape_cast %113 : vector<1x8x8xf32> to vector<8x8xf32>
    %115 = vector.shape_cast %112 : vector<8x8xf32> to vector<1x8x8xf32>
    tpu.vector_store %arg14[%c2_51, %c0_52, %c0_53], %115 {strides = array<i32>} : memref<3x8x8xf32, #tpu.memory_space<vmem>>, vector<1x8x8xf32>,
    return
  }
  func.func @transform_0(%arg0: i32) -> (i32, i32) {
    %c0_i32 = arith.constant 0 : i32
    %c0_i32_0 = arith.constant 0 : i32
    return %arg0, %c0_i32 : i32, i32
  }
  func.func @transform_1(%arg0: i32) -> (i32, i32, i32) {
    %c0_i32 = arith.constant 0 : i32
    %c0_i32_0 = arith.constant 0 : i32
    %c0_i32_1 = arith.constant 0 : i32
    return %c0_i32, %arg0, %c0_i32_0 : i32, i32, i32
  }
  func.func @transform_2(%arg0: i32) -> (i32, i32) {
    %c0_i32 = arith.constant 0 : i32
    %c0_i32_0 = arith.constant 0 : i32
    return %arg0, %c0_i32 : i32, i32
  }
  func.func @transform_3(%arg0: i32) -> (i32, i32) {
    %c0_i32 = arith.constant 0 : i32
    %c0_i32_0 = arith.constant 0 : i32
    %c0_i32_1 = arith.constant 0 : i32
    return %c0_i32, %c0_i32_0 : i32, i32
  }
  func.func @transform_4(%arg0: i32) -> (i32, i32) {
    %c0_i32 = arith.constant 0 : i32
    %c0_i32_0 = arith.constant 0 : i32
    %c0_i32_1 = arith.constant 0 : i32
    return %c0_i32, %c0_i32_0 : i32, i32
  }
  func.func @transform_5(%arg0: i32) -> (i32, i32) {
    %c0_i32 = arith.constant 0 : i32
    %c0_i32_0 = arith.constant 0 : i32
    %c0_i32_1 = arith.constant 0 : i32
    return %c0_i32, %c0_i32_0 : i32, i32
  }
  func.func @transform_6(%arg0: i32) -> (i32, i32) {
    %c0_i32 = arith.constant 0 : i32
    %c0_i32_0 = arith.constant 0 : i32
    %c0_i32_1 = arith.constant 0 : i32
    return %c0_i32, %c0_i32_0 : i32, i32
  }
  func.func @transform_7(%arg0: i32) -> (i32, i32) {
    %c0_i32 = arith.constant 0 : i32
    %c0_i32_0 = arith.constant 0 : i32
    %c0_i32_1 = arith.constant 0 : i32
    return %c0_i32, %c0_i32_0 : i32, i32
  }
  func.func @transform_8(%arg0: i32) -> (i32, i32) {
    %c0_i32 = arith.constant 0 : i32
    %c0_i32_0 = arith.constant 0 : i32
    %c0_i32_1 = arith.constant 0 : i32
    return %c0_i32, %c0_i32_0 : i32, i32
  }
  func.func @transform_9(%arg0: i32) -> (i32, i32) {
    %c0_i32 = arith.constant 0 : i32
    %c0_i32_0 = arith.constant 0 : i32
    %c0_i32_1 = arith.constant 0 : i32
    return %c0_i32, %c0_i32_0 : i32, i32
  }
  func.func @transform_10(%arg0: i32) -> (i32, i32) {
    %c0_i32 = arith.constant 0 : i32
    %c0_i32_0 = arith.constant 0 : i32
    %c0_i32_1 = arith.constant 0 : i32
    return %c0_i32, %c0_i32_0 : i32, i32
  }
  func.func @transform_11(%arg0: i32) -> (i32, i32) {
    %c0_i32 = arith.constant 0 : i32
    %c0_i32_0 = arith.constant 0 : i32
    %c0_i32_1 = arith.constant 0 : i32
    return %c0_i32, %c0_i32_0 : i32, i32
  }
  func.func @transform_12(%arg0: i32) -> (i32, i32) {
    %c0_i32 = arith.constant 0 : i32
    %c0_i32_0 = arith.constant 0 : i32
    return %arg0, %c0_i32 : i32, i32
  }
  func.func @transform_13(%arg0: i32) -> (i32, i32, i32) {
    %c0_i32 = arith.constant 0 : i32
    %c0_i32_0 = arith.constant 0 : i32
    %c0_i32_1 = arith.constant 0 : i32
    return %c0_i32, %arg0, %c0_i32_0 : i32, i32, i32
  }
}

</mosaic_0001>

<llo_original>
// kernel: gcp_embedding_forward.4
$region0: #{gcp_embedding_forward.4}
  #allocation0 [shape = 'u32[]', space=smem, size = 0x4, offset = 0x4, fixed_abs, tag = 'smem constant byte address 0x4 - core index']
  #allocation1 [shape = 'u32[144,128]{1,0:T(1,128)}', space=vmem, size = 0x12000, scoped, tag = 'internal scratch']
  #allocation2 [shape = 's32[1]{0}', space=sflag, size = 0x4, scoped, tag = 'scoped memory for gcp_embedding_forward.4']
  #allocation3 [shape = 'u8[512]{0}', space=smem, size = 0x200, scoped, tag = 'prefetched SMEM operand 0']
  %s0 = inlined_call_operand.vmem [shape: s32[16], index: 0, kind: input, shape index: {}]
  %s1 = inlined_call_operand.vmem [shape: f32[16,28], index: 1, kind: input, shape index: {}]
  %s2 = inlined_call_operand.vmem [shape: f32[8,28], index: 2, kind: output, shape index: {}]
  %s3 = sld [smem:[#allocation0]]
  $region25: #{gcp_embedding_forward.4} parent=0
    _
  %s5 = ssub.s32 1, %s3
  %s6 = scalar_select 0, %s5, %s3
  %s7 = sshll.u32 %s0, 4
  %s8 = int_to_ptr.vmem [resolvable:$true] %s7
  %10 = dma.vmem_to_smem %s8, 16, [#allocation3], [#allocation2]
  %11 = dma.done [#allocation2], 16
  %12 = sfence
  // Predicated region
  $region2: #{gcp_embedding_forward.4} parent=0 // pred_check
    _
  $region3: #{gcp_embedding_forward.4} parent=0 // pred_check_branch
    %14 = sbr.rel (0) target = $region5
  $region4: #{gcp_embedding_forward.4} parent=0 // pred_region
    _
  $region5: #{gcp_embedding_forward.4} parent=0 // pred_fallthru
    _
  %p15 = scmp.eq.s32.totalorder 0, 0
  // Predicated region
  $region6: #{gcp_embedding_forward.4} parent=0 // pred_check
    %p16 = pneg %p15
  $region7: #{gcp_embedding_forward.4} parent=0 // pred_check_branch
    %18 = sbr.rel (%p16) target = $region9
  $region8: #{gcp_embedding_forward.4} parent=0 // pred_region
    %vm19 = vcmask 228352
    %20 = vst.msk [vmem:[%s2] sm:$0xff] %vm19, 0.0
  $region9: #{gcp_embedding_forward.4} parent=0 // pred_fallthru
    _
  %s21 = smul.u32 0, 16
  loop: start=0, step=1, limit=16
  $region10: #{gcp_embedding_forward.4} parent=0 // loop_pre_header
    _
  $region11: #{gcp_embedding_forward.4} parent=0 // loop_header
    %s23 = sphi 0, %s27
    %p24 = scmp.ge.s32.totalorder %s23, 16
  $region12: #{gcp_embedding_forward.4} parent=0 // loop_header_branch
    %26 = sbr.rel (%p24) target = $region16
  $region13: #{gcp_embedding_forward.4} parent=0 // loop_body
    %s28 = sadd.s32 %s21, %s23
    %s29 = sld [smem:[#allocation3 + %s28]]
    %s30 = scalar_lea.vmem %s2, %s29
    %v31 = vld [vmem:[%s30] sm:$0x1]
    %s32 = scalar_lea.vmem %s1, %s23
    %v33 = vld [vmem:[%s32] sm:$0x1]
    %v34 = vadd.f32 %v31, %v33
    %vm35 = vcmask 221184
    %36 = vst.msk [vmem:[%s30] sm:$0x1] %vm35, %v34
  $region14: #{gcp_embedding_forward.4} parent=0 // loop_footer
    %s27 = sadd.s32 1, %s23
  $region15: #{gcp_embedding_forward.4} parent=0 // loop_footer_branch
    %22 = sbr.rel target = $region11
  $region16: #{gcp_embedding_forward.4} parent=0 // loop_exit
    _
  // Predicated region
  $region17: #{gcp_embedding_forward.4} parent=0 // pred_check
    _
  $region18: #{gcp_embedding_forward.4} parent=0 // pred_check_branch
    %38 = sbr.rel (0) target = $region20
  $region19: #{gcp_embedding_forward.4} parent=0 // pred_region
    _
  $region20: #{gcp_embedding_forward.4} parent=0 // pred_fallthru
    _
  // Predicated region
  $region21: #{gcp_embedding_forward.4} parent=0 // pred_check
    _
  $region22: #{gcp_embedding_forward.4} parent=0 // pred_check_branch
    %40 = sbr.rel (0) target = $region24
  $region23: #{gcp_embedding_forward.4} parent=0 // pred_region
    _
  $region24: #{gcp_embedding_forward.4} parent=0 // pred_fallthru
    _

// kernel: gcp_embedding_forward.5
$region0: #{gcp_embedding_forward.5}
  #allocation0 [shape = 'u32[]', space=smem, size = 0x4, offset = 0x4, fixed_abs, tag = 'smem constant byte address 0x4 - core index']
  #allocation1 [shape = 'u32[144,128]{1,0:T(1,128)}', space=vmem, size = 0x12000, scoped, tag = 'internal scratch']
  %s0 = inlined_call_operand.vmem [shape: f32[8,16], index: 0, kind: input, shape index: {}]
  %s1 = inlined_call_operand.vmem [shape: f32[3,8,4], index: 1, kind: input, shape index: {}]
  %s2 = inlined_call_operand.vmem [shape: f32[8,28], index: 2, kind: input, shape index: {}]
  %s3 = inlined_call_operand.vmem [shape: f32[1,16], index: 3, kind: input, shape index: {}]
  %s4 = inlined_call_operand.vmem [shape: f32[1,16], index: 4, kind: input, shape index: {}]
  %s5 = inlined_call_operand.vmem [shape: f32[4,8], index: 5, kind: input, shape index: {}]
  %s6 = inlined_call_operand.vmem [shape: f32[4,9], index: 6, kind: input, shape index: {}]
  %s7 = inlined_call_operand.vmem [shape: f32[33,32], index: 7, kind: input, shape index: {}]
  %s8 = inlined_call_operand.vmem [shape: f32[1,32], index: 8, kind: input, shape index: {}]
  %s9 = inlined_call_operand.vmem [shape: f32[8,8], index: 9, kind: input, shape index: {}]
  %s10 = inlined_call_operand.vmem [shape: f32[32,8], index: 10, kind: input, shape index: {}]
  %s11 = inlined_call_operand.vmem [shape: f32[1,8], index: 11, kind: input, shape index: {}]
  %s12 = inlined_call_operand.hbm [shape: f32[8,32], index: 12, kind: output, shape index: {0}]
  %s13 = inlined_call_operand.hbm [shape: f32[3,8,8], index: 13, kind: output, shape index: {1}]
  %14 = xla_tuple %s12, %s13
  %s15 = sld [smem:[#allocation0]]
  $region66: #{gcp_embedding_forward.5} parent=0
    _
  %s17 = ssub.s32 1, %s15
  %s18 = scalar_select 0, %s17, %s15
  $region1: #{gcp_embedding_forward.5} parent=0
    #allocation2 [shape = 'u8[4096]{0}', space=vmem, size = 0x1000, scoped, tag = 'output window, operand 0, single buffered']
    #allocation3 [shape = 's32[1]{0}', space=sflag, size = 0x4, scoped, tag = 'scoped memory for gcp_embedding_forward.5']
    #allocation4 [shape = 'u8[12288]{0}', space=vmem, size = 0x3000, scoped, tag = 'output window, operand 1, single buffered']
    #allocation5 [shape = 's32[1]{0}', space=sflag, size = 0x4, scoped, tag = 'scoped memory for gcp_embedding_forward.5']
    %19 = vsyncpa [#allocation3], 0
    %20 = vsyncpa [#allocation5], 0
    // Predicated region
    $region2: #{gcp_embedding_forward.5} parent=1 // pred_check
      _
    $region3: #{gcp_embedding_forward.5} parent=1 // pred_check_branch
      %22 = sbr.rel (0) target = $region5
    $region4: #{gcp_embedding_forward.5} parent=1 // pred_region
      _
    $region5: #{gcp_embedding_forward.5} parent=1 // pred_fallthru
      _
    // Predicated region
    $region6: #{gcp_embedding_forward.5} parent=1 // pred_check
      _
    $region7: #{gcp_embedding_forward.5} parent=1 // pred_check_branch
      %24 = sbr.rel (0) target = $region9
    $region8: #{gcp_embedding_forward.5} parent=1 // pred_region
      _
    $region9: #{gcp_embedding_forward.5} parent=1 // pred_fallthru
      _
    // Predicated region
    $region10: #{gcp_embedding_forward.5} parent=1 // pred_check
      _
    $region11: #{gcp_embedding_forward.5} parent=1 // pred_check_branch
      %26 = sbr.rel (0) target = $region13
    $region12: #{gcp_embedding_forward.5} parent=1 // pred_region
      _
    $region13: #{gcp_embedding_forward.5} parent=1 // pred_fallthru
      _
    // Predicated region
    $region14: #{gcp_embedding_forward.5} parent=1 // pred_check
      _
    $region15: #{gcp_embedding_forward.5} parent=1 // pred_check_branch
      %28 = sbr.rel (0) target = $region17
    $region16: #{gcp_embedding_forward.5} parent=1 // pred_region
      _
    $region17: #{gcp_embedding_forward.5} parent=1 // pred_fallthru
      _
    // Predicated region
    $region18: #{gcp_embedding_forward.5} parent=1 // pred_check
      _
    $region19: #{gcp_embedding_forward.5} parent=1 // pred_check_branch
      %30 = sbr.rel (0) target = $region21
    $region20: #{gcp_embedding_forward.5} parent=1 // pred_region
      _
    $region21: #{gcp_embedding_forward.5} parent=1 // pred_fallthru
      _
    // Predicated region
    $region22: #{gcp_embedding_forward.5} parent=1 // pred_check
      _
    $region23: #{gcp_embedding_forward.5} parent=1 // pred_check_branch
      %32 = sbr.rel (0) target = $region25
    $region24: #{gcp_embedding_forward.5} parent=1 // pred_region
      _
    $region25: #{gcp_embedding_forward.5} parent=1 // pred_fallthru
      _
    // Predicated region
    $region26: #{gcp_embedding_forward.5} parent=1 // pred_check
      _
    $region27: #{gcp_embedding_forward.5} parent=1 // pred_check_branch
      %34 = sbr.rel (0) target = $region29
    $region28: #{gcp_embedding_forward.5} parent=1 // pred_region
      _
    $region29: #{gcp_embedding_forward.5} parent=1 // pred_fallthru
      _
    // Predicated region
    $region30: #{gcp_embedding_forward.5} parent=1 // pred_check
      _
    $region31: #{gcp_embedding_forward.5} parent=1 // pred_check_branch
      %36 = sbr.rel (0) target = $region33
    $region32: #{gcp_embedding_forward.5} parent=1 // pred_region
      _
    $region33: #{gcp_embedding_forward.5} parent=1 // pred_fallthru
      _
    // Predicated region
    $region34: #{gcp_embedding_forward.5} parent=1 // pred_check
      _
    $region35: #{gcp_embedding_forward.5} parent=1 // pred_check_branch
      %38 = sbr.rel (0) target = $region37
    $region36: #{gcp_embedding_forward.5} parent=1 // pred_region
      _
    $region37: #{gcp_embedding_forward.5} parent=1 // pred_fallthru
      _
    // Predicated region
    $region38: #{gcp_embedding_forward.5} parent=1 // pred_check
      _
    $region39: #{gcp_embedding_forward.5} parent=1 // pred_check_branch
      %40 = sbr.rel (0) target = $region41
    $region40: #{gcp_embedding_forward.5} parent=1 // pred_region
      _
    $region41: #{gcp_embedding_forward.5} parent=1 // pred_fallthru
      _
    // Predicated region
    $region42: #{gcp_embedding_forward.5} parent=1 // pred_check
      _
    $region43: #{gcp_embedding_forward.5} parent=1 // pred_check_branch
      %42 = sbr.rel (0) target = $region45
    $region44: #{gcp_embedding_forward.5} parent=1 // pred_region
      _
    $region45: #{gcp_embedding_forward.5} parent=1 // pred_fallthru
      _
    // Predicated region
    $region46: #{gcp_embedding_forward.5} parent=1 // pred_check
      _
    $region47: #{gcp_embedding_forward.5} parent=1 // pred_check_branch
      %44 = sbr.rel (0) target = $region49
    $region48: #{gcp_embedding_forward.5} parent=1 // pred_region
      _
    $region49: #{gcp_embedding_forward.5} parent=1 // pred_fallthru
      _
    %v45 = vld [vmem:[%s0] sm:$0xff]
    %v46 = vld [vmem:[%s1] sm:$0xff]
    %s47 = scalar_lea.vmem %s1, 8
    %v48 = vld [vmem:[%s47] sm:$0xff]
    %s49 = scalar_lea.vmem %s1, 16
    %v50 = vld [vmem:[%s49] sm:$0xff]
    %vm51 = vcmask 130048
    %v52 = vsel %vm51, %v45, 0.0
    %53 = vadd.xlane.f32.xlu0 %v52
    %v54 = vpop.xlane.xlu0 %53
    %v55 = vrcp.pop 16.0
    %v56 = vmul.f32 %v54, %v55
    %v57 = vsub.f32 %v45, %v56
    %v58 = vmul.f32 %v57, %v57
    %v59 = vsel %vm51, %v58, 0.0
    %60 = vadd.xlane.f32.xlu0 %v59
    %v61 = vpop.xlane.xlu0 %60
    %v62 = vmul.f32 %v61, %v55
    %v63 = vadd.f32 %v62, 1e-05
    %v64 = vrsqrt.pop %v63
    %v65 = vmul.f32 %v57, %v64
    %v66 = vld [vmem:[%s3] sm:$0x1]
    %v68 = vlaneseq
    %v69 = vshrl.u32 %v68, 7
    %v70 = vsub.s32 0, %v69
    %v71 = vrot.slane %v66, %v70
    %v73 = vmul.f32 %v65, %v71
    %v74 = vld [vmem:[%s4] sm:$0x1]
    %v76 = vlaneseq
    %v77 = vshrl.u32 %v76, 7
    %v78 = vsub.s32 0, %v77
    %v79 = vrot.slane %v74, %v78
    %v81 = vadd.f32 %v73, %v79
    %v82 = vmul.f32 %v46, %v46
    %v83 = vmul.f32 %v48, %v48
    %v84 = vadd.f32 %v82, %v83
    %v85 = vmul.f32 %v50, %v50
    %v86 = vadd.f32 %v84, %v85
    %v87 = vmax.f32 %v86, 1e-08
    %vm88 = vcmask 31744
    %v89 = vsel %vm88, %v87, 0.0
    %90 = vadd.xlane.f32.xlu0 %v89
    %v91 = vpop.xlane.xlu0 %90
    %v92 = vrcp.pop 4.0
    %v93 = vmul.f32 %v91, %v92
    %v94 = vrsqrt.pop %v93
    %v95 = vmul.f32 %v46, %v94
    %v96 = vmul.f32 %v48, %v94
    %v97 = vmul.f32 %v50, %v94
    %v98 = vld [vmem:[%s5] sm:$0xf]
    %v100 = vsel %vm88, %v95, 0
    %v103 = vsel %vm88, %v96, 0
    %v106 = vsel %vm88, %v97, 0
    %vm108 = vcmask 1043456
    %v110 = vsel %vm108, %v98, 0
    %112 = vmatprep.subr.mxu0 0.0
    %113 = vmatpush1.msra.mxu0 0.0
    %114 = vmatprep.subr.mxu0 0.0
    %115 = vmatpush1.msra.mxu0 0.0
    %116 = vmatprep.subr.mxu0 0.0
    %117 = vmatpush1.msra.mxu0 0.0
    %118 = vmatprep.subr.mxu0 0.0
    %119 = vmatpush1.msra.mxu0 0.0
    %120 = vmatprep.subr.mxu0 0.0
    %121 = vmatpush1.msra.mxu0 0.0
    %122 = vmatprep.subr.mxu0 0.0
    %123 = vmatpush1.msra.mxu0 0.0
    %124 = vmatprep.subr.mxu0 0.0
    %125 = vmatpush1.msra.mxu0 0.0
    %126 = vmatprep.subr.mxu0 0.0
    %127 = vmatpush1.msra.mxu0 0.0
    %128 = vmatprep.subr.mxu0 0.0
    %129 = vmatpush1.msra.mxu0 0.0
    %130 = vmatprep.subr.mxu0 0.0
    %131 = vmatpush1.msra.mxu0 0.0
    %132 = vmatprep.subr.mxu0 0.0
    %133 = vmatpush1.msra.mxu0 0.0
    %134 = vmatprep.subr.mxu0 0.0
    %135 = vmatpush1.msra.mxu0 0.0
    %136 = vmatprep.subr.mxu0 0.0
    %137 = vmatpush1.msra.mxu0 0.0
    %138 = vmatprep.subr.mxu0 0.0
    %139 = vmatpush1.msra.mxu0 0.0
    %140 = vmatprep.subr.mxu0 0.0
    %141 = vmatpush1.msra.mxu0 0.0
    %142 = vmatprep.subr.mxu0 0.0
    %143 = vmatpush1.msra.mxu0 %v110
    %144 = vmatprep.subr.mxu0 0.0
    %145 = vmatpush2.msra.mxu0 0.0
    %146 = vmatprep.subr.mxu0 0.0
    %147 = vmatpush2.msra.mxu0 0.0
    %148 = vmatprep.subr.mxu0 0.0
    %149 = vmatpush2.msra.mxu0 0.0
    %150 = vmatprep.subr.mxu0 0.0
    %151 = vmatpush2.msra.mxu0 0.0
    %152 = vmatprep.subr.mxu0 0.0
    %153 = vmatpush2.msra.mxu0 0.0
    %154 = vmatprep.subr.mxu0 0.0
    %155 = vmatpush2.msra.mxu0 0.0
    %156 = vmatprep.subr.mxu0 0.0
    %157 = vmatpush2.msra.mxu0 0.0
    %158 = vmatprep.subr.mxu0 0.0
    %159 = vmatpush2.msra.mxu0 0.0
    %160 = vmatprep.subr.mxu0 0.0
    %161 = vmatpush2.msra.mxu0 0.0
    %162 = vmatprep.subr.mxu0 0.0
    %163 = vmatpush2.msra.mxu0 0.0
    %164 = vmatprep.subr.mxu0 0.0
    %165 = vmatpush2.msra.mxu0 0.0
    %166 = vmatprep.subr.mxu0 0.0
    %167 = vmatpush2.msra.mxu0 0.0
    %168 = vmatprep.subr.mxu0 0.0
    %169 = vmatpush2.msra.mxu0 0.0
    %170 = vmatprep.subr.mxu0 0.0
    %171 = vmatpush2.msra.mxu0 0.0
    %172 = vmatprep.subr.mxu0 0.0
    %173 = vmatpush2.msra.mxu0 0.0
    %174 = vmatprep.subr.mxu0 0.0
    %175 = vmatpush2.msra.mxu0 0.0
    %176 = vmatprep.mubr.f32.mxu0 0.0
    %177 = vmatmul.mubr.f32.gmra.mxu0 %v100
    %v178 = vpop.f32.mrf.mxu0
    %v179 = vadd.f32 0.0, %v178
    %v180 = vpop.f32.mrf.mxu0
    %181 = vmatprep.mubr.f32.mxu0 0.0
    %182 = vmatmul.mubr.f32.gmra.mxu0 %v103
    %v183 = vpop.f32.mrf.mxu0
    %v184 = vadd.f32 0.0, %v183
    %v185 = vpop.f32.mrf.mxu0
    %186 = vmatprep.mubr.f32.mxu0 0.0
    %187 = vmatmul.mubr.f32.gmra.mxu0 %v106
    %v188 = vpop.f32.mrf.mxu0
    %v189 = vadd.f32 0.0, %v188
    %v190 = vpop.f32.mrf.mxu0
    %191 = vdwg.mxu0
    %v192 = vld [vmem:[%s6] sm:$0xf]
    %v194 = vsel %vm108, %v192, 0
    %196 = vmatprep.subr.mxu0 0.0
    %197 = vmatpush1.msra.mxu0 0.0
    %198 = vmatprep.subr.mxu0 0.0
    %199 = vmatpush1.msra.mxu0 0.0
    %200 = vmatprep.subr.mxu0 0.0
    %201 = vmatpush1.msra.mxu0 0.0
    %202 = vmatprep.subr.mxu0 0.0
    %203 = vmatpush1.msra.mxu0 0.0
    %204 = vmatprep.subr.mxu0 0.0
    %205 = vmatpush1.msra.mxu0 0.0
    %206 = vmatprep.subr.mxu0 0.0
    %207 = vmatpush1.msra.mxu0 0.0
    %208 = vmatprep.subr.mxu0 0.0
    %209 = vmatpush1.msra.mxu0 0.0
    %210 = vmatprep.subr.mxu0 0.0
    %211 = vmatpush1.msra.mxu0 0.0
    %212 = vmatprep.subr.mxu0 0.0
    %213 = vmatpush1.msra.mxu0 0.0
    %214 = vmatprep.subr.mxu0 0.0
    %215 = vmatpush1.msra.mxu0 0.0
    %216 = vmatprep.subr.mxu0 0.0
    %217 = vmatpush1.msra.mxu0 0.0
    %218 = vmatprep.subr.mxu0 0.0
    %219 = vmatpush1.msra.mxu0 0.0
    %220 = vmatprep.subr.mxu0 0.0
    %221 = vmatpush1.msra.mxu0 0.0
    %222 = vmatprep.subr.mxu0 0.0
    %223 = vmatpush1.msra.mxu0 0.0
    %224 = vmatprep.subr.mxu0 0.0
    %225 = vmatpush1.msra.mxu0 0.0
    %226 = vmatprep.subr.mxu0 0.0
    %227 = vmatpush1.msra.mxu0 %v194
    %228 = vmatprep.subr.mxu0 0.0
    %229 = vmatpush2.msra.mxu0 0.0
    %230 = vmatprep.subr.mxu0 0.0
    %231 = vmatpush2.msra.mxu0 0.0
    %232 = vmatprep.subr.mxu0 0.0
    %233 = vmatpush2.msra.mxu0 0.0
    %234 = vmatprep.subr.mxu0 0.0
    %235 = vmatpush2.msra.mxu0 0.0
    %236 = vmatprep.subr.mxu0 0.0
    %237 = vmatpush2.msra.mxu0 0.0
    %238 = vmatprep.subr.mxu0 0.0
    %239 = vmatpush2.msra.mxu0 0.0
    %240 = vmatprep.subr.mxu0 0.0
    %241 = vmatpush2.msra.mxu0 0.0
    %242 = vmatprep.subr.mxu0 0.0
    %243 = vmatpush2.msra.mxu0 0.0
    %244 = vmatprep.subr.mxu0 0.0
    %245 = vmatpush2.msra.mxu0 0.0
    %246 = vmatprep.subr.mxu0 0.0
    %247 = vmatpush2.msra.mxu0 0.0
    %248 = vmatprep.subr.mxu0 0.0
    %249 = vmatpush2.msra.mxu0 0.0
    %250 = vmatprep.subr.mxu0 0.0
    %251 = vmatpush2.msra.mxu0 0.0
    %252 = vmatprep.subr.mxu0 0.0
    %253 = vmatpush2.msra.mxu0 0.0
    %254 = vmatprep.subr.mxu0 0.0
    %255 = vmatpush2.msra.mxu0 0.0
    %256 = vmatprep.subr.mxu0 0.0
    %257 = vmatpush2.msra.mxu0 0.0
    %258 = vmatprep.subr.mxu0 0.0
    %259 = vmatpush2.msra.mxu0 0.0
    %260 = vmatprep.mubr.f32.mxu0 0.0
    %261 = vmatmul.mubr.f32.gmra.mxu0 %v100
    %v262 = vpop.f32.mrf.mxu0
    %v263 = vadd.f32 0.0, %v262
    %v264 = vpop.f32.mrf.mxu0
    %265 = vmatprep.mubr.f32.mxu0 0.0
    %266 = vmatmul.mubr.f32.gmra.mxu0 %v103
    %v267 = vpop.f32.mrf.mxu0
    %v268 = vadd.f32 0.0, %v267
    %v269 = vpop.f32.mrf.mxu0
    %270 = vmatprep.mubr.f32.mxu0 0.0
    %271 = vmatmul.mubr.f32.gmra.mxu0 %v106
    %v272 = vpop.f32.mrf.mxu0
    %v273 = vadd.f32 0.0, %v272
    %v274 = vpop.f32.mrf.mxu0
    %275 = vdwg.mxu0
    %v276 = vmul.f32 %v179, %v179
    %v277 = vmul.f32 %v184, %v184
    %v278 = vadd.f32 %v276, %v277
    %v279 = vmul.f32 %v189, %v189
    %v280 = vadd.f32 %v278, %v279
    %v281 = vadd.f32 %v280, 1e-08
    %v282 = vrsqrt.pop %v281
    %v283 = vmul.f32 %v281, %v282
    %vm284 = vcmp.eq.f32.partialorder %v281, inf
    %v285 = vsel %vm284, %v281, %v283
    %vm286 = vcmp.eq.f32.partialorder %v281, 0.0
    %v287 = vand.u32 %v281, 2147483648
    %v288 = vsel %vm286, %v287, %v285
    %v289 = vld [vmem:[%s2] sm:$0xff]
    %v290 = vmax.f32 %v289, 1.0
    %v291 = vmul.f32 %v263, %v289
    %293 = vrot.lane.b32.xlu0 %v289, 119
    %v294 = vpop.permute.xlu0 %293
    %v296 = vmul.f32 %v268, %v294
    %v297 = vadd.f32 %v291, %v296
    %298 = vrot.lane.b32.xlu0 %v289, 110
    %v299 = vpop.permute.xlu0 %298
    %v301 = vmul.f32 %v273, %v299
    %v302 = vadd.f32 %v297, %v301
    %304 = vset.pattern.permute.xlu0 27
    %305 = vperm.xlu0 %304, %v290
    %v306 = vpop.permute.xlu0 %305
    %v308 = vrcp.pop %v306
    %v309 = vmul.f32 %v302, %v308
    %311 = vrot.lane.b32.xlu0 %v288, 16
    %v312 = vpop.permute.xlu0 %311
    %315 = vrot.lane.b32.xlu0 %v309, 24
    %v316 = vpop.permute.xlu0 %315
    %v318 = vsel %vm51, %v81, %v312
    %vm319 = vcmask 195584
    %v320 = vsel %vm319, %v318, %v316
    %v321 = vld [vmem:[%s7] sm:$0xff]
    %v322 = vld [vmem:[%s7 + $0x8] sm:$0xff]
    %v323 = vld [vmem:[%s7 + $0x10] sm:$0xff]
    %v324 = vld [vmem:[%s7 + $0x18] sm:$0xff]
    %v325 = vld [vmem:[%s7 + $0x20] sm:$0x1]
    %v326 = vld [vmem:[%s8] sm:$0x1]
    %v328 = vlaneseq
    %v329 = vshrl.u32 %v328, 7
    %v330 = vsub.s32 0, %v329
    %v331 = vrot.slane %v326, %v330
    %vm333 = vcmask 269312
    %v335 = vsel %vm333, %v320, 0
    %vm337 = vcmask 1040384
    %v339 = vsel %vm337, %v325, 0
    %341 = vmatprep.subr.mxu0 0.0
    %342 = vmatpush1.msra.mxu0 0.0
    %343 = vmatprep.subr.mxu0 0.0
    %344 = vmatpush1.msra.mxu0 0.0
    %345 = vmatprep.subr.mxu0 0.0
    %346 = vmatpush1.msra.mxu0 0.0
    %347 = vmatprep.subr.mxu0 0.0
    %348 = vmatpush1.msra.mxu0 0.0
    %349 = vmatprep.subr.mxu0 0.0
    %350 = vmatpush1.msra.mxu0 0.0
    %351 = vmatprep.subr.mxu0 0.0
    %352 = vmatpush1.msra.mxu0 0.0
    %353 = vmatprep.subr.mxu0 0.0
    %354 = vmatpush1.msra.mxu0 0.0
    %355 = vmatprep.subr.mxu0 0.0
    %356 = vmatpush1.msra.mxu0 0.0
    %357 = vmatprep.subr.mxu0 0.0
    %358 = vmatpush1.msra.mxu0 0.0
    %359 = vmatprep.subr.mxu0 0.0
    %360 = vmatpush1.msra.mxu0 0.0
    %361 = vmatprep.subr.mxu0 0.0
    %362 = vmatpush1.msra.mxu0 0.0
    %363 = vmatprep.subr.mxu0 0.0
    %364 = vmatpush1.msra.mxu0 %v339
    %365 = vmatprep.subr.mxu0 0.0
    %366 = vmatpush1.msra.mxu0 %v324
    %367 = vmatprep.subr.mxu0 0.0
    %368 = vmatpush1.msra.mxu0 %v323
    %369 = vmatprep.subr.mxu0 0.0
    %370 = vmatpush1.msra.mxu0 %v322
    %371 = vmatprep.subr.mxu0 0.0
    %372 = vmatpush1.msra.mxu0 %v321
    %373 = vmatprep.subr.mxu0 0.0
    %374 = vmatpush2.msra.mxu0 0.0
    %375 = vmatprep.subr.mxu0 0.0
    %376 = vmatpush2.msra.mxu0 0.0
    %377 = vmatprep.subr.mxu0 0.0
    %378 = vmatpush2.msra.mxu0 0.0
    %379 = vmatprep.subr.mxu0 0.0
    %380 = vmatpush2.msra.mxu0 0.0
    %381 = vmatprep.subr.mxu0 0.0
    %382 = vmatpush2.msra.mxu0 0.0
    %383 = vmatprep.subr.mxu0 0.0
    %384 = vmatpush2.msra.mxu0 0.0
    %385 = vmatprep.subr.mxu0 0.0
    %386 = vmatpush2.msra.mxu0 0.0
    %387 = vmatprep.subr.mxu0 0.0
    %388 = vmatpush2.msra.mxu0 0.0
    %389 = vmatprep.subr.mxu0 0.0
    %390 = vmatpush2.msra.mxu0 0.0
    %391 = vmatprep.subr.mxu0 0.0
    %392 = vmatpush2.msra.mxu0 0.0
    %393 = vmatprep.subr.mxu0 0.0
    %394 = vmatpush2.msra.mxu0 0.0
    %395 = vmatprep.subr.mxu0 0.0
    %396 = vmatpush2.msra.mxu0 0.0
    %397 = vmatprep.subr.mxu0 0.0
    %398 = vmatpush2.msra.mxu0 0.0
    %399 = vmatprep.subr.mxu0 0.0
    %400 = vmatpush2.msra.mxu0 0.0
    %401 = vmatprep.subr.mxu0 0.0
    %402 = vmatpush2.msra.mxu0 0.0
    %403 = vmatprep.subr.mxu0 0.0
    %404 = vmatpush2.msra.mxu0 0.0
    %405 = vmatprep.mubr.f32.mxu0 0.0
    %406 = vmatmul.mubr.f32.gmra.mxu0 %v335
    %v407 = vpop.f32.mrf.mxu0
    %v408 = vadd.f32 %v331, %v407
    %v409 = vpop.f32.mrf.mxu0
    %410 = vdwg.mxu0
    %v411 = vld [vmem:[%s10] sm:$0xff]
    %v412 = vld [vmem:[%s10 + $0x8] sm:$0xff]
    %v413 = vld [vmem:[%s10 + $0x10] sm:$0xff]
    %v414 = vld [vmem:[%s10 + $0x18] sm:$0xff]
    %v415 = vld [vmem:[%s11] sm:$0x1]
    %v417 = vlaneseq
    %v418 = vshrl.u32 %v417, 7
    %v419 = vsub.s32 0, %v418
    %v420 = vrot.slane %v415, %v419
    %vm422 = vcmask 261120
    %v424 = vsel %vm422, %v408, 0
    %426 = vmatprep.subr.mxu0 0.0
    %427 = vmatpush1.msra.mxu0 0.0
    %428 = vmatprep.subr.mxu0 0.0
    %429 = vmatpush1.msra.mxu0 0.0
    %430 = vmatprep.subr.mxu0 0.0
    %431 = vmatpush1.msra.mxu0 0.0
    %432 = vmatprep.subr.mxu0 0.0
    %433 = vmatpush1.msra.mxu0 0.0
    %434 = vmatprep.subr.mxu0 0.0
    %435 = vmatpush1.msra.mxu0 0.0
    %436 = vmatprep.subr.mxu0 0.0
    %437 = vmatpush1.msra.mxu0 0.0
    %438 = vmatprep.subr.mxu0 0.0
    %439 = vmatpush1.msra.mxu0 0.0
    %440 = vmatprep.subr.mxu0 0.0
    %441 = vmatpush1.msra.mxu0 0.0
    %442 = vmatprep.subr.mxu0 0.0
    %443 = vmatpush1.msra.mxu0 0.0
    %444 = vmatprep.subr.mxu0 0.0
    %445 = vmatpush1.msra.mxu0 0.0
    %446 = vmatprep.subr.mxu0 0.0
    %447 = vmatpush1.msra.mxu0 0.0
    %448 = vmatprep.subr.mxu0 0.0
    %449 = vmatpush1.msra.mxu0 0.0
    %450 = vmatprep.subr.mxu0 0.0
    %451 = vmatpush1.msra.mxu0 %v414
    %452 = vmatprep.subr.mxu0 0.0
    %453 = vmatpush1.msra.mxu0 %v413
    %454 = vmatprep.subr.mxu0 0.0
    %455 = vmatpush1.msra.mxu0 %v412
    %456 = vmatprep.subr.mxu0 0.0
    %457 = vmatpush1.msra.mxu0 %v411
    %458 = vmatprep.subr.mxu0 0.0
    %459 = vmatpush2.msra.mxu0 0.0
    %460 = vmatprep.subr.mxu0 0.0
    %461 = vmatpush2.msra.mxu0 0.0
    %462 = vmatprep.subr.mxu0 0.0
    %463 = vmatpush2.msra.mxu0 0.0
    %464 = vmatprep.subr.mxu0 0.0
    %465 = vmatpush2.msra.mxu0 0.0
    %466 = vmatprep.subr.mxu0 0.0
    %467 = vmatpush2.msra.mxu0 0.0
    %468 = vmatprep.subr.mxu0 0.0
    %469 = vmatpush2.msra.mxu0 0.0
    %470 = vmatprep.subr.mxu0 0.0
    %471 = vmatpush2.msra.mxu0 0.0
    %472 = vmatprep.subr.mxu0 0.0
    %473 = vmatpush2.msra.mxu0 0.0
    %474 = vmatprep.subr.mxu0 0.0
    %475 = vmatpush2.msra.mxu0 0.0
    %476 = vmatprep.subr.mxu0 0.0
    %477 = vmatpush2.msra.mxu0 0.0
    %478 = vmatprep.subr.mxu0 0.0
    %479 = vmatpush2.msra.mxu0 0.0
    %480 = vmatprep.subr.mxu0 0.0
    %481 = vmatpush2.msra.mxu0 0.0
    %482 = vmatprep.subr.mxu0 0.0
    %483 = vmatpush2.msra.mxu0 0.0
    %484 = vmatprep.subr.mxu0 0.0
    %485 = vmatpush2.msra.mxu0 0.0
    %486 = vmatprep.subr.mxu0 0.0
    %487 = vmatpush2.msra.mxu0 0.0
    %488 = vmatprep.subr.mxu0 0.0
    %489 = vmatpush2.msra.mxu0 0.0
    %490 = vmatprep.mubr.f32.mxu0 0.0
    %491 = vmatmul.mubr.f32.gmra.mxu0 %v424
    %v492 = vpop.f32.mrf.mxu0
    %v493 = vadd.f32 %v420, %v492
    %v494 = vpop.f32.mrf.mxu0
    %495 = vdwg.mxu0
    %v496 = vxor.u32 %v493, 2147483648
    %v497 = vmul.f32 %v496, 1.442695
    %v498 = vpow.pop %v497
    %v499 = vadd.f32 %v498, 1.0
    %v500 = vrcp.pop %v499
    %v501 = vmul.f32 1.0, %v500
    %v502 = vld [vmem:[%s9] sm:$0xff]
    %vm503 = vcmask 64512
    %v505 = vsel %vm503, %v179, 0
    %v508 = vsel %vm503, %v184, 0
    %v511 = vsel %vm503, %v189, 0
    %513 = vmatprep.subr.mxu0 0.0
    %514 = vmatpush1.msra.mxu0 0.0
    %515 = vmatprep.subr.mxu0 0.0
    %516 = vmatpush1.msra.mxu0 0.0
    %517 = vmatprep.subr.mxu0 0.0
    %518 = vmatpush1.msra.mxu0 0.0
    %519 = vmatprep.subr.mxu0 0.0
    %520 = vmatpush1.msra.mxu0 0.0
    %521 = vmatprep.subr.mxu0 0.0
    %522 = vmatpush1.msra.mxu0 0.0
    %523 = vmatprep.subr.mxu0 0.0
    %524 = vmatpush1.msra.mxu0 0.0
    %525 = vmatprep.subr.mxu0 0.0
    %526 = vmatpush1.msra.mxu0 0.0
    %527 = vmatprep.subr.mxu0 0.0
    %528 = vmatpush1.msra.mxu0 0.0
    %529 = vmatprep.subr.mxu0 0.0
    %530 = vmatpush1.msra.mxu0 0.0
    %531 = vmatprep.subr.mxu0 0.0
    %532 = vmatpush1.msra.mxu0 0.0
    %533 = vmatprep.subr.mxu0 0.0
    %534 = vmatpush1.msra.mxu0 0.0
    %535 = vmatprep.subr.mxu0 0.0
    %536 = vmatpush1.msra.mxu0 0.0
    %537 = vmatprep.subr.mxu0 0.0
    %538 = vmatpush1.msra.mxu0 0.0
    %539 = vmatprep.subr.mxu0 0.0
    %540 = vmatpush1.msra.mxu0 0.0
    %541 = vmatprep.subr.mxu0 0.0
    %542 = vmatpush1.msra.mxu0 0.0
    %543 = vmatprep.subr.mxu0 0.0
    %544 = vmatpush1.msra.mxu0 %v502
    %545 = vmatprep.subr.mxu0 0.0
    %546 = vmatpush2.msra.mxu0 0.0
    %547 = vmatprep.subr.mxu0 0.0
    %548 = vmatpush2.msra.mxu0 0.0
    %549 = vmatprep.subr.mxu0 0.0
    %550 = vmatpush2.msra.mxu0 0.0
    %551 = vmatprep.subr.mxu0 0.0
    %552 = vmatpush2.msra.mxu0 0.0
    %553 = vmatprep.subr.mxu0 0.0
    %554 = vmatpush2.msra.mxu0 0.0
    %555 = vmatprep.subr.mxu0 0.0
    %556 = vmatpush2.msra.mxu0 0.0
    %557 = vmatprep.subr.mxu0 0.0
    %558 = vmatpush2.msra.mxu0 0.0
    %559 = vmatprep.subr.mxu0 0.0
    %560 = vmatpush2.msra.mxu0 0.0
    %561 = vmatprep.subr.mxu0 0.0
    %562 = vmatpush2.msra.mxu0 0.0
    %563 = vmatprep.subr.mxu0 0.0
    %564 = vmatpush2.msra.mxu0 0.0
    %565 = vmatprep.subr.mxu0 0.0
    %566 = vmatpush2.msra.mxu0 0.0
    %567 = vmatprep.subr.mxu0 0.0
    %568 = vmatpush2.msra.mxu0 0.0
    %569 = vmatprep.subr.mxu0 0.0
    %570 = vmatpush2.msra.mxu0 0.0
    %571 = vmatprep.subr.mxu0 0.0
    %572 = vmatpush2.msra.mxu0 0.0
    %573 = vmatprep.subr.mxu0 0.0
    %574 = vmatpush2.msra.mxu0 0.0
    %575 = vmatprep.subr.mxu0 0.0
    %576 = vmatpush2.msra.mxu0 0.0
    %577 = vmatprep.mubr.f32.mxu0 0.0
    %578 = vmatmul.mubr.f32.gmra.mxu0 %v505
    %v579 = vpop.f32.mrf.mxu0
    %v580 = vadd.f32 0.0, %v579
    %v581 = vpop.f32.mrf.mxu0
    %582 = vmatprep.mubr.f32.mxu0 0.0
    %583 = vmatmul.mubr.f32.gmra.mxu0 %v508
    %v584 = vpop.f32.mrf.mxu0
    %v585 = vadd.f32 0.0, %v584
    %v586 = vpop.f32.mrf.mxu0
    %587 = vmatprep.mubr.f32.mxu0 0.0
    %588 = vmatmul.mubr.f32.gmra.mxu0 %v511
    %v589 = vpop.f32.mrf.mxu0
    %v590 = vadd.f32 0.0, %v589
    %v591 = vpop.f32.mrf.mxu0
    %592 = vdwg.mxu0
    %593 = vst.msk [vmem:[#allocation2] sm:$0xff] %vm422, %v408
    %v594 = vmul.f32 %v580, %v501
    %595 = vst.msk [vmem:[#allocation4] sm:$0xff] %vm503, %v594
    %v596 = vmul.f32 %v585, %v501
    %s597 = scalar_lea.vmem [#allocation4], 8
    %598 = vst.msk [vmem:[%s597] sm:$0xff] %vm503, %v596
    %v599 = vmul.f32 %v590, %v501
    %s600 = scalar_lea.vmem [#allocation4], 16
    %601 = vst.msk [vmem:[%s600] sm:$0xff] %vm503, %v599
    // Predicated region
    $region50: #{gcp_embedding_forward.5} parent=1 // pred_check
      _
    $region51: #{gcp_embedding_forward.5} parent=1 // pred_check_branch
      %603 = sbr.rel (0) target = $region53
    $region52: #{gcp_embedding_forward.5} parent=1 // pred_region
      %s605 = ssub.s32 128, 128
      %606 = vsyncadd [#allocation3], %s605
      %s608 = sshll.u32 [#allocation2], 4
      %s609 = int_to_ptr.vmem [resolvable:$true] %s608
      %611 = dma.vmem_to_hbm [thread:$0]  %s609, 128, %s12, [#allocation3]
    $region53: #{gcp_embedding_forward.5} parent=1 // pred_fallthru
      _
    // Predicated region
    $region54: #{gcp_embedding_forward.5} parent=1 // pred_check
      _
    $region55: #{gcp_embedding_forward.5} parent=1 // pred_check_branch
      %613 = sbr.rel (0) target = $region57
    $region56: #{gcp_embedding_forward.5} parent=1 // pred_region
      %s615 = ssub.s32 384, 384
      %616 = vsyncadd [#allocation5], %s615
      %s617 = sshll.u32 [#allocation4], 4
      %s618 = int_to_ptr.vmem [resolvable:$true] %s617
      %623 = dma.vmem_to_hbm [thread:$0]  %s618, 384, %s13, [#allocation5], 128, 128, 8
    $region57: #{gcp_embedding_forward.5} parent=1 // pred_fallthru
      _
    // Predicated region
    $region58: #{gcp_embedding_forward.5} parent=1 // pred_check
      _
    $region59: #{gcp_embedding_forward.5} parent=1 // pred_check_branch
      %625 = sbr.rel (0) target = $region61
    $region60: #{gcp_embedding_forward.5} parent=1 // pred_region
      %626 = dma.done [#allocation3], 128
    $region61: #{gcp_embedding_forward.5} parent=1 // pred_fallthru
      _
    // Predicated region
    $region62: #{gcp_embedding_forward.5} parent=1 // pred_check
      _
    $region63: #{gcp_embedding_forward.5} parent=1 // pred_check_branch
      %628 = sbr.rel (0) target = $region65
    $region64: #{gcp_embedding_forward.5} parent=1 // pred_region
      %629 = dma.done [#allocation5], 384
    $region65: #{gcp_embedding_forward.5} parent=1 // pred_fallthru
      _
    %630 = vsyncpa [#allocation3], 1
    %631 = vsyncpa [#allocation5], 1

// kernel: gcp_embedding_forward.3
$region0: #{gcp_embedding_forward.3}
  #allocation0 [shape = 'u32[]', space=smem, size = 0x4, offset = 0x4, fixed_abs, tag = 'smem constant byte address 0x4 - core index']
  #allocation1 [shape = 'u32[144,128]{1,0:T(1,128)}', space=vmem, size = 0x12000, scoped, tag = 'internal scratch']
  %s0 = inlined_call_operand.vmem [shape: f32[16,8], index: 0, kind: input, shape index: {}]
  %s1 = inlined_call_operand.vmem [shape: f32[3,16,2], index: 1, kind: input, shape index: {}]
  %s2 = inlined_call_operand.vmem [shape: f32[16,28], index: 2, kind: input, shape index: {}]
  %s3 = inlined_call_operand.vmem [shape: f32[1,8], index: 3, kind: input, shape index: {}]
  %s4 = inlined_call_operand.vmem [shape: f32[1,8], index: 4, kind: input, shape index: {}]
  %s5 = inlined_call_operand.vmem [shape: f32[2,4], index: 5, kind: input, shape index: {}]
  %s6 = inlined_call_operand.vmem [shape: f32[2,9], index: 6, kind: input, shape index: {}]
  %s7 = inlined_call_operand.vmem [shape: f32[21,16], index: 7, kind: input, shape index: {}]
  %s8 = inlined_call_operand.vmem [shape: f32[1,16], index: 8, kind: input, shape index: {}]
  %s9 = inlined_call_operand.vmem [shape: f32[4,4], index: 9, kind: input, shape index: {}]
  %s10 = inlined_call_operand.vmem [shape: f32[16,4], index: 10, kind: input, shape index: {}]
  %s11 = inlined_call_operand.vmem [shape: f32[1,4], index: 11, kind: input, shape index: {}]
  %s12 = inlined_call_operand.hbm [shape: f32[16,16], index: 12, kind: output, shape index: {0}]
  %s13 = inlined_call_operand.vmem [shape: f32[3,16,4], index: 13, kind: output, shape index: {1}]
  %14 = xla_tuple %s12, %s13
  %s15 = sld [smem:[#allocation0]]
  $region66: #{gcp_embedding_forward.3} parent=0
    _
  %s17 = ssub.s32 1, %s15
  %s18 = scalar_select 0, %s17, %s15
  $region1: #{gcp_embedding_forward.3} parent=0
    #allocation2 [shape = 'u8[8192]{0}', space=vmem, size = 0x2000, scoped, tag = 'output window, operand 0, single buffered']
    #allocation3 [shape = 's32[1]{0}', space=sflag, size = 0x4, scoped, tag = 'scoped memory for gcp_embedding_forward.3']
    %19 = vsyncpa [#allocation3], 0
    // Predicated region
    $region2: #{gcp_embedding_forward.3} parent=1 // pred_check
      _
    $region3: #{gcp_embedding_forward.3} parent=1 // pred_check_branch
      %21 = sbr.rel (0) target = $region5
    $region4: #{gcp_embedding_forward.3} parent=1 // pred_region
      _
    $region5: #{gcp_embedding_forward.3} parent=1 // pred_fallthru
      _
    // Predicated region
    $region6: #{gcp_embedding_forward.3} parent=1 // pred_check
      _
    $region7: #{gcp_embedding_forward.3} parent=1 // pred_check_branch
      %23 = sbr.rel (0) target = $region9
    $region8: #{gcp_embedding_forward.3} parent=1 // pred_region
      _
    $region9: #{gcp_embedding_forward.3} parent=1 // pred_fallthru
      _
    // Predicated region
    $region10: #{gcp_embedding_forward.3} parent=1 // pred_check
      _
    $region11: #{gcp_embedding_forward.3} parent=1 // pred_check_branch
      %25 = sbr.rel (0) target = $region13
    $region12: #{gcp_embedding_forward.3} parent=1 // pred_region
      _
    $region13: #{gcp_embedding_forward.3} parent=1 // pred_fallthru
      _
    // Predicated region
    $region14: #{gcp_embedding_forward.3} parent=1 // pred_check
      _
    $region15: #{gcp_embedding_forward.3} parent=1 // pred_check_branch
      %27 = sbr.rel (0) target = $region17
    $region16: #{gcp_embedding_forward.3} parent=1 // pred_region
      _
    $region17: #{gcp_embedding_forward.3} parent=1 // pred_fallthru
      _
    // Predicated region
    $region18: #{gcp_embedding_forward.3} parent=1 // pred_check
      _
    $region19: #{gcp_embedding_forward.3} parent=1 // pred_check_branch
      %29 = sbr.rel (0) target = $region21
    $region20: #{gcp_embedding_forward.3} parent=1 // pred_region
      _
    $region21: #{gcp_embedding_forward.3} parent=1 // pred_fallthru
      _
    // Predicated region
    $region22: #{gcp_embedding_forward.3} parent=1 // pred_check
      _
    $region23: #{gcp_embedding_forward.3} parent=1 // pred_check_branch
      %31 = sbr.rel (0) target = $region25
    $region24: #{gcp_embedding_forward.3} parent=1 // pred_region
      _
    $region25: #{gcp_embedding_forward.3} parent=1 // pred_fallthru
      _
    // Predicated region
    $region26: #{gcp_embedding_forward.3} parent=1 // pred_check
      _
    $region27: #{gcp_embedding_forward.3} parent=1 // pred_check_branch
      %33 = sbr.rel (0) target = $region29
    $region28: #{gcp_embedding_forward.3} parent=1 // pred_region
      _
    $region29: #{gcp_embedding_forward.3} parent=1 // pred_fallthru
      _
    // Predicated region
    $region30: #{gcp_embedding_forward.3} parent=1 // pred_check
      _
    $region31: #{gcp_embedding_forward.3} parent=1 // pred_check_branch
      %35 = sbr.rel (0) target = $region33
    $region32: #{gcp_embedding_forward.3} parent=1 // pred_region
      _
    $region33: #{gcp_embedding_forward.3} parent=1 // pred_fallthru
      _
    // Predicated region
    $region34: #{gcp_embedding_forward.3} parent=1 // pred_check
      _
    $region35: #{gcp_embedding_forward.3} parent=1 // pred_check_branch
      %37 = sbr.rel (0) target = $region37
    $region36: #{gcp_embedding_forward.3} parent=1 // pred_region
      _
    $region37: #{gcp_embedding_forward.3} parent=1 // pred_fallthru
      _
    // Predicated region
    $region38: #{gcp_embedding_forward.3} parent=1 // pred_check
      _
    $region39: #{gcp_embedding_forward.3} parent=1 // pred_check_branch
      %39 = sbr.rel (0) target = $region41
    $region40: #{gcp_embedding_forward.3} parent=1 // pred_region
      _
    $region41: #{gcp_embedding_forward.3} parent=1 // pred_fallthru
      _
    // Predicated region
    $region42: #{gcp_embedding_forward.3} parent=1 // pred_check
      _
    $region43: #{gcp_embedding_forward.3} parent=1 // pred_check_branch
      %41 = sbr.rel (0) target = $region45
    $region44: #{gcp_embedding_forward.3} parent=1 // pred_region
      _
    $region45: #{gcp_embedding_forward.3} parent=1 // pred_fallthru
      _
    // Predicated region
    $region46: #{gcp_embedding_forward.3} parent=1 // pred_check
      _
    $region47: #{gcp_embedding_forward.3} parent=1 // pred_check_branch
      %43 = sbr.rel (0) target = $region49
    $region48: #{gcp_embedding_forward.3} parent=1 // pred_region
      _
    $region49: #{gcp_embedding_forward.3} parent=1 // pred_fallthru
      _
    %v44 = vld [vmem:[%s0] sm:$0xff]
    %v45 = vld [vmem:[%s0 + $0x8] sm:$0xff]
    %v46 = vld [vmem:[%s1] sm:$0xff]
    %v47 = vld [vmem:[%s1 + $0x8] sm:$0xff]
    %s48 = scalar_lea.vmem %s1, 16
    %v49 = vld [vmem:[%s48] sm:$0xff]
    %v50 = vld [vmem:[%s48 + $0x8] sm:$0xff]
    %s51 = scalar_lea.vmem %s1, 32
    %v52 = vld [vmem:[%s51] sm:$0xff]
    %v53 = vld [vmem:[%s51 + $0x8] sm:$0xff]
    %vm54 = vcmask 64512
    %v55 = vsel %vm54, %v44, 0.0
    %56 = vadd.xlane.f32.xlu0 %v55
    %v57 = vpop.xlane.xlu0 %56
    %v58 = vsel %vm54, %v45, 0.0
    %59 = vadd.xlane.f32.xlu0 %v58
    %v60 = vpop.xlane.xlu0 %59
    %v61 = vrcp.pop 8.0
    %v62 = vmul.f32 %v57, %v61
    %v63 = vmul.f32 %v60, %v61
    %v64 = vsub.f32 %v44, %v62
    %v65 = vsub.f32 %v45, %v63
    %v66 = vmul.f32 %v64, %v64
    %v67 = vmul.f32 %v65, %v65
    %v68 = vsel %vm54, %v66, 0.0
    %69 = vadd.xlane.f32.xlu0 %v68
    %v70 = vpop.xlane.xlu0 %69
    %v71 = vsel %vm54, %v67, 0.0
    %72 = vadd.xlane.f32.xlu0 %v71
    %v73 = vpop.xlane.xlu0 %72
    %v74 = vmul.f32 %v70, %v61
    %v75 = vmul.f32 %v73, %v61
    %v76 = vadd.f32 %v74, 1e-05
    %v77 = vadd.f32 %v75, 1e-05
    %v78 = vrsqrt.pop %v76
    %v79 = vrsqrt.pop %v77
    %v80 = vmul.f32 %v64, %v78
    %v81 = vmul.f32 %v65, %v79
    %v82 = vld [vmem:[%s3] sm:$0x1]
    %v84 = vlaneseq
    %v85 = vshrl.u32 %v84, 7
    %v86 = vsub.s32 0, %v85
    %v87 = vrot.slane %v82, %v86
    %v89 = vmul.f32 %v80, %v87
    %v90 = vmul.f32 %v81, %v87
    %v91 = vld [vmem:[%s4] sm:$0x1]
    %v93 = vlaneseq
    %v94 = vshrl.u32 %v93, 7
    %v95 = vsub.s32 0, %v94
    %v96 = vrot.slane %v91, %v95
    %v98 = vadd.f32 %v89, %v96
    %v99 = vadd.f32 %v90, %v96
    %v100 = vmul.f32 %v46, %v46
    %v101 = vmul.f32 %v47, %v47
    %v102 = vmul.f32 %v49, %v49
    %v103 = vmul.f32 %v50, %v50
    %v104 = vadd.f32 %v100, %v102
    %v105 = vadd.f32 %v101, %v103
    %v106 = vmul.f32 %v52, %v52
    %v107 = vmul.f32 %v53, %v53
    %v108 = vadd.f32 %v104, %v106
    %v109 = vadd.f32 %v105, %v107
    %v110 = vmax.f32 %v108, 1e-08
    %v111 = vmax.f32 %v109, 1e-08
    %vm112 = vcmask 15360
    %v113 = vsel %vm112, %v110, 0.0
    %114 = vadd.xlane.f32.xlu0 %v113
    %v115 = vpop.xlane.xlu0 %114
    %v116 = vsel %vm112, %v111, 0.0
    %117 = vadd.xlane.f32.xlu0 %v116
    %v118 = vpop.xlane.xlu0 %117
    %v119 = vrcp.pop 2.0
    %v120 = vmul.f32 %v115, %v119
    %v121 = vmul.f32 %v118, %v119
    %v122 = vrsqrt.pop %v120
    %v123 = vrsqrt.pop %v121
    %v124 = vmul.f32 %v46, %v122
    %v125 = vmul.f32 %v47, %v123
    %v126 = vmul.f32 %v49, %v122
    %v127 = vmul.f32 %v50, %v123
    %v128 = vmul.f32 %v52, %v122
    %v129 = vmul.f32 %v53, %v123
    %v130 = vld [vmem:[%s5] sm:$0x3]
    %v132 = vsel %vm112, %v124, 0
    %v135 = vsel %vm112, %v125, 0
    %v138 = vsel %vm112, %v126, 0
    %v141 = vsel %vm112, %v127, 0
    %v144 = vsel %vm112, %v128, 0
    %v147 = vsel %vm112, %v129, 0
    %vm149 = vcmask 1041408
    %v151 = vsel %vm149, %v130, 0
    %153 = vmatprep.subr.mxu0 0.0
    %154 = vmatpush1.msra.mxu0 0.0
    %155 = vmatprep.subr.mxu0 0.0
    %156 = vmatpush1.msra.mxu0 0.0
    %157 = vmatprep.subr.mxu0 0.0
    %158 = vmatpush1.msra.mxu0 0.0
    %159 = vmatprep.subr.mxu0 0.0
    %160 = vmatpush1.msra.mxu0 0.0
    %161 = vmatprep.subr.mxu0 0.0
    %162 = vmatpush1.msra.mxu0 0.0
    %163 = vmatprep.subr.mxu0 0.0
    %164 = vmatpush1.msra.mxu0 0.0
    %165 = vmatprep.subr.mxu0 0.0
    %166 = vmatpush1.msra.mxu0 0.0
    %167 = vmatprep.subr.mxu0 0.0
    %168 = vmatpush1.msra.mxu0 0.0
    %169 = vmatprep.subr.mxu0 0.0
    %170 = vmatpush1.msra.mxu0 0.0
    %171 = vmatprep.subr.mxu0 0.0
    %172 = vmatpush1.msra.mxu0 0.0
    %173 = vmatprep.subr.mxu0 0.0
    %174 = vmatpush1.msra.mxu0 0.0
    %175 = vmatprep.subr.mxu0 0.0
    %176 = vmatpush1.msra.mxu0 0.0
    %177 = vmatprep.subr.mxu0 0.0
    %178 = vmatpush1.msra.mxu0 0.0
    %179 = vmatprep.subr.mxu0 0.0
    %180 = vmatpush1.msra.mxu0 0.0
    %181 = vmatprep.subr.mxu0 0.0
    %182 = vmatpush1.msra.mxu0 0.0
    %183 = vmatprep.subr.mxu0 0.0
    %184 = vmatpush1.msra.mxu0 %v151
    %185 = vmatprep.subr.mxu0 0.0
    %186 = vmatpush2.msra.mxu0 0.0
    %187 = vmatprep.subr.mxu0 0.0
    %188 = vmatpush2.msra.mxu0 0.0
    %189 = vmatprep.subr.mxu0 0.0
    %190 = vmatpush2.msra.mxu0 0.0
    %191 = vmatprep.subr.mxu0 0.0
    %192 = vmatpush2.msra.mxu0 0.0
    %193 = vmatprep.subr.mxu0 0.0
    %194 = vmatpush2.msra.mxu0 0.0
    %195 = vmatprep.subr.mxu0 0.0
    %196 = vmatpush2.msra.mxu0 0.0
    %197 = vmatprep.subr.mxu0 0.0
    %198 = vmatpush2.msra.mxu0 0.0
    %199 = vmatprep.subr.mxu0 0.0
    %200 = vmatpush2.msra.mxu0 0.0
    %201 = vmatprep.subr.mxu0 0.0
    %202 = vmatpush2.msra.mxu0 0.0
    %203 = vmatprep.subr.mxu0 0.0
    %204 = vmatpush2.msra.mxu0 0.0
    %205 = vmatprep.subr.mxu0 0.0
    %206 = vmatpush2.msra.mxu0 0.0
    %207 = vmatprep.subr.mxu0 0.0
    %208 = vmatpush2.msra.mxu0 0.0
    %209 = vmatprep.subr.mxu0 0.0
    %210 = vmatpush2.msra.mxu0 0.0
    %211 = vmatprep.subr.mxu0 0.0
    %212 = vmatpush2.msra.mxu0 0.0
    %213 = vmatprep.subr.mxu0 0.0
    %214 = vmatpush2.msra.mxu0 0.0
    %215 = vmatprep.subr.mxu0 0.0
    %216 = vmatpush2.msra.mxu0 0.0
    %217 = vmatprep.mubr.f32.mxu0 0.0
    %218 = vmatmul.mubr.f32.gmra.mxu0 %v132
    %v219 = vpop.f32.mrf.mxu0
    %v220 = vadd.f32 0.0, %v219
    %v221 = vpop.f32.mrf.mxu0
    %222 = vmatprep.mubr.f32.mxu0 0.0
    %223 = vmatmul.mubr.f32.gmra.mxu0 %v135
    %v224 = vpop.f32.mrf.mxu0
    %v225 = vadd.f32 0.0, %v224
    %v226 = vpop.f32.mrf.mxu0
    %227 = vmatprep.mubr.f32.mxu0 0.0
    %228 = vmatmul.mubr.f32.gmra.mxu0 %v138
    %v229 = vpop.f32.mrf.mxu0
    %v230 = vadd.f32 0.0, %v229
    %v231 = vpop.f32.mrf.mxu0
    %232 = vmatprep.mubr.f32.mxu0 0.0
    %233 = vmatmul.mubr.f32.gmra.mxu0 %v141
    %v234 = vpop.f32.mrf.mxu0
    %v235 = vadd.f32 0.0, %v234
    %v236 = vpop.f32.mrf.mxu0
    %237 = vmatprep.mubr.f32.mxu0 0.0
    %238 = vmatmul.mubr.f32.gmra.mxu0 %v144
    %v239 = vpop.f32.mrf.mxu0
    %v240 = vadd.f32 0.0, %v239
    %v241 = vpop.f32.mrf.mxu0
    %242 = vmatprep.mubr.f32.mxu0 0.0
    %243 = vmatmul.mubr.f32.gmra.mxu0 %v147
    %v244 = vpop.f32.mrf.mxu0
    %v245 = vadd.f32 0.0, %v244
    %v246 = vpop.f32.mrf.mxu0
    %247 = vdwg.mxu0
    %v248 = vld [vmem:[%s6] sm:$0x3]
    %v250 = vsel %vm149, %v248, 0
    %252 = vmatprep.subr.mxu0 0.0
    %253 = vmatpush1.msra.mxu0 0.0
    %254 = vmatprep.subr.mxu0 0.0
    %255 = vmatpush1.msra.mxu0 0.0
    %256 = vmatprep.subr.mxu0 0.0
    %257 = vmatpush1.msra.mxu0 0.0
    %258 = vmatprep.subr.mxu0 0.0
    %259 = vmatpush1.msra.mxu0 0.0
    %260 = vmatprep.subr.mxu0 0.0
    %261 = vmatpush1.msra.mxu0 0.0
    %262 = vmatprep.subr.mxu0 0.0
    %263 = vmatpush1.msra.mxu0 0.0
    %264 = vmatprep.subr.mxu0 0.0
    %265 = vmatpush1.msra.mxu0 0.0
    %266 = vmatprep.subr.mxu0 0.0
    %267 = vmatpush1.msra.mxu0 0.0
    %268 = vmatprep.subr.mxu0 0.0
    %269 = vmatpush1.msra.mxu0 0.0
    %270 = vmatprep.subr.mxu0 0.0
    %271 = vmatpush1.msra.mxu0 0.0
    %272 = vmatprep.subr.mxu0 0.0
    %273 = vmatpush1.msra.mxu0 0.0
    %274 = vmatprep.subr.mxu0 0.0
    %275 = vmatpush1.msra.mxu0 0.0
    %276 = vmatprep.subr.mxu0 0.0
    %277 = vmatpush1.msra.mxu0 0.0
    %278 = vmatprep.subr.mxu0 0.0
    %279 = vmatpush1.msra.mxu0 0.0
    %280 = vmatprep.subr.mxu0 0.0
    %281 = vmatpush1.msra.mxu0 0.0
    %282 = vmatprep.subr.mxu0 0.0
    %283 = vmatpush1.msra.mxu0 %v250
    %284 = vmatprep.subr.mxu0 0.0
    %285 = vmatpush2.msra.mxu0 0.0
    %286 = vmatprep.subr.mxu0 0.0
    %287 = vmatpush2.msra.mxu0 0.0
    %288 = vmatprep.subr.mxu0 0.0
    %289 = vmatpush2.msra.mxu0 0.0
    %290 = vmatprep.subr.mxu0 0.0
    %291 = vmatpush2.msra.mxu0 0.0
    %292 = vmatprep.subr.mxu0 0.0
    %293 = vmatpush2.msra.mxu0 0.0
    %294 = vmatprep.subr.mxu0 0.0
    %295 = vmatpush2.msra.mxu0 0.0
    %296 = vmatprep.subr.mxu0 0.0
    %297 = vmatpush2.msra.mxu0 0.0
    %298 = vmatprep.subr.mxu0 0.0
    %299 = vmatpush2.msra.mxu0 0.0
    %300 = vmatprep.subr.mxu0 0.0
    %301 = vmatpush2.msra.mxu0 0.0
    %302 = vmatprep.subr.mxu0 0.0
    %303 = vmatpush2.msra.mxu0 0.0
    %304 = vmatprep.subr.mxu0 0.0
    %305 = vmatpush2.msra.mxu0 0.0
    %306 = vmatprep.subr.mxu0 0.0
    %307 = vmatpush2.msra.mxu0 0.0
    %308 = vmatprep.subr.mxu0 0.0
    %309 = vmatpush2.msra.mxu0 0.0
    %310 = vmatprep.subr.mxu0 0.0
    %311 = vmatpush2.msra.mxu0 0.0
    %312 = vmatprep.subr.mxu0 0.0
    %313 = vmatpush2.msra.mxu0 0.0
    %314 = vmatprep.subr.mxu0 0.0
    %315 = vmatpush2.msra.mxu0 0.0
    %316 = vmatprep.mubr.f32.mxu0 0.0
    %317 = vmatmul.mubr.f32.gmra.mxu0 %v132
    %v318 = vpop.f32.mrf.mxu0
    %v319 = vadd.f32 0.0, %v318
    %v320 = vpop.f32.mrf.mxu0
    %321 = vmatprep.mubr.f32.mxu0 0.0
    %322 = vmatmul.mubr.f32.gmra.mxu0 %v135
    %v323 = vpop.f32.mrf.mxu0
    %v324 = vadd.f32 0.0, %v323
    %v325 = vpop.f32.mrf.mxu0
    %326 = vmatprep.mubr.f32.mxu0 0.0
    %327 = vmatmul.mubr.f32.gmra.mxu0 %v138
    %v328 = vpop.f32.mrf.mxu0
    %v329 = vadd.f32 0.0, %v328
    %v330 = vpop.f32.mrf.mxu0
    %331 = vmatprep.mubr.f32.mxu0 0.0
    %332 = vmatmul.mubr.f32.gmra.mxu0 %v141
    %v333 = vpop.f32.mrf.mxu0
    %v334 = vadd.f32 0.0, %v333
    %v335 = vpop.f32.mrf.mxu0
    %336 = vmatprep.mubr.f32.mxu0 0.0
    %337 = vmatmul.mubr.f32.gmra.mxu0 %v144
    %v338 = vpop.f32.mrf.mxu0
    %v339 = vadd.f32 0.0, %v338
    %v340 = vpop.f32.mrf.mxu0
    %341 = vmatprep.mubr.f32.mxu0 0.0
    %342 = vmatmul.mubr.f32.gmra.mxu0 %v147
    %v343 = vpop.f32.mrf.mxu0
    %v344 = vadd.f32 0.0, %v343
    %v345 = vpop.f32.mrf.mxu0
    %346 = vdwg.mxu0
    %v347 = vmul.f32 %v220, %v220
    %v348 = vmul.f32 %v225, %v225
    %v349 = vmul.f32 %v230, %v230
    %v350 = vmul.f32 %v235, %v235
    %v351 = vadd.f32 %v347, %v349
    %v352 = vadd.f32 %v348, %v350
    %v353 = vmul.f32 %v240, %v240
    %v354 = vmul.f32 %v245, %v245
    %v355 = vadd.f32 %v351, %v353
    %v356 = vadd.f32 %v352, %v354
    %v357 = vadd.f32 %v355, 1e-08
    %v358 = vadd.f32 %v356, 1e-08
    %v359 = vrsqrt.pop %v357
    %v360 = vmul.f32 %v357, %v359
    %vm361 = vcmp.eq.f32.partialorder %v357, inf
    %v362 = vsel %vm361, %v357, %v360
    %vm363 = vcmp.eq.f32.partialorder %v357, 0.0
    %v364 = vand.u32 %v357, 2147483648
    %v365 = vsel %vm363, %v364, %v362
    %v366 = vrsqrt.pop %v358
    %v367 = vmul.f32 %v358, %v366
    %vm368 = vcmp.eq.f32.partialorder %v358, inf
    %v369 = vsel %vm368, %v358, %v367
    %vm370 = vcmp.eq.f32.partialorder %v358, 0.0
    %v371 = vand.u32 %v358, 2147483648
    %v372 = vsel %vm370, %v371, %v369
    %v373 = vld [vmem:[%s2] sm:$0xff]
    %v374 = vld [vmem:[%s2 + $0x8] sm:$0xff]
    %v375 = vmax.f32 %v373, 1.0
    %v376 = vmax.f32 %v374, 1.0
    %v377 = vmul.f32 %v319, %v373
    %v378 = vmul.f32 %v324, %v374
    %381 = vrot.lane.b32.xlu0 %v373, 119
    %v382 = vpop.permute.xlu0 %381
    %383 = vrot.lane.b32.xlu0 %v374, 119
    %v384 = vpop.permute.xlu0 %383
    %v387 = vmul.f32 %v329, %v382
    %v388 = vmul.f32 %v334, %v384
    %v389 = vadd.f32 %v377, %v387
    %v390 = vadd.f32 %v378, %v388
    %391 = vrot.lane.b32.xlu0 %v373, 110
    %v392 = vpop.permute.xlu0 %391
    %393 = vrot.lane.b32.xlu0 %v374, 110
    %v394 = vpop.permute.xlu0 %393
    %v397 = vmul.f32 %v339, %v392
    %v398 = vmul.f32 %v344, %v394
    %v399 = vadd.f32 %v389, %v397
    %v400 = vadd.f32 %v390, %v398
    %402 = vset.pattern.permute.xlu0 27
    %403 = vperm.xlu0 %402, %v375
    %v404 = vpop.permute.xlu0 %403
    %407 = vset.pattern.permute.xlu0 27
    %408 = vperm.xlu0 %407, %v376
    %v409 = vpop.permute.xlu0 %408
    %v411 = vrcp.pop %v404
    %v412 = vmul.f32 %v399, %v411
    %v413 = vrcp.pop %v409
    %v414 = vmul.f32 %v400, %v413
    %417 = vrot.lane.b32.xlu0 %v365, 8
    %v418 = vpop.permute.xlu0 %417
    %419 = vrot.lane.b32.xlu0 %v372, 8
    %v420 = vpop.permute.xlu0 %419
    %425 = vrot.lane.b32.xlu0 %v412, 12
    %v426 = vpop.permute.xlu0 %425
    %427 = vrot.lane.b32.xlu0 %v414, 12
    %v428 = vpop.permute.xlu0 %427
    %v431 = vsel %vm54, %v98, %v418
    %v432 = vsel %vm54, %v99, %v420
    %vm433 = vcmask 97280
    %v434 = vsel %vm433, %v431, %v426
    %v435 = vsel %vm433, %v432, %v428
    %v436 = vld [vmem:[%s7] sm:$0xff]
    %v437 = vld [vmem:[%s7 + $0x8] sm:$0xff]
    %v438 = vld [vmem:[%s7 + $0x10] sm:$0x1f]
    %v439 = vld [vmem:[%s8] sm:$0x1]
    %v441 = vlaneseq
    %v442 = vshrl.u32 %v441, 7
    %v443 = vsub.s32 0, %v442
    %v444 = vrot.slane %v439, %v443
    %vm446 = vcmask 171008
    %v448 = vsel %vm446, %v434, 0
    %v451 = vsel %vm446, %v435, 0
    %vm453 = vcmask 1044480
    %v455 = vsel %vm453, %v438, 0
    %457 = vmatprep.subr.mxu0 0.0
    %458 = vmatpush1.msra.mxu0 0.0
    %459 = vmatprep.subr.mxu0 0.0
    %460 = vmatpush1.msra.mxu0 0.0
    %461 = vmatprep.subr.mxu0 0.0
    %462 = vmatpush1.msra.mxu0 0.0
    %463 = vmatprep.subr.mxu0 0.0
    %464 = vmatpush1.msra.mxu0 0.0
    %465 = vmatprep.subr.mxu0 0.0
    %466 = vmatpush1.msra.mxu0 0.0
    %467 = vmatprep.subr.mxu0 0.0
    %468 = vmatpush1.msra.mxu0 0.0
    %469 = vmatprep.subr.mxu0 0.0
    %470 = vmatpush1.msra.mxu0 0.0
    %471 = vmatprep.subr.mxu0 0.0
    %472 = vmatpush1.msra.mxu0 0.0
    %473 = vmatprep.subr.mxu0 0.0
    %474 = vmatpush1.msra.mxu0 0.0
    %475 = vmatprep.subr.mxu0 0.0
    %476 = vmatpush1.msra.mxu0 0.0
    %477 = vmatprep.subr.mxu0 0.0
    %478 = vmatpush1.msra.mxu0 0.0
    %479 = vmatprep.subr.mxu0 0.0
    %480 = vmatpush1.msra.mxu0 0.0
    %481 = vmatprep.subr.mxu0 0.0
    %482 = vmatpush1.msra.mxu0 0.0
    %483 = vmatprep.subr.mxu0 0.0
    %484 = vmatpush1.msra.mxu0 %v455
    %485 = vmatprep.subr.mxu0 0.0
    %486 = vmatpush1.msra.mxu0 %v437
    %487 = vmatprep.subr.mxu0 0.0
    %488 = vmatpush1.msra.mxu0 %v436
    %489 = vmatprep.subr.mxu0 0.0
    %490 = vmatpush2.msra.mxu0 0.0
    %491 = vmatprep.subr.mxu0 0.0
    %492 = vmatpush2.msra.mxu0 0.0
    %493 = vmatprep.subr.mxu0 0.0
    %494 = vmatpush2.msra.mxu0 0.0
    %495 = vmatprep.subr.mxu0 0.0
    %496 = vmatpush2.msra.mxu0 0.0
    %497 = vmatprep.subr.mxu0 0.0
    %498 = vmatpush2.msra.mxu0 0.0
    %499 = vmatprep.subr.mxu0 0.0
    %500 = vmatpush2.msra.mxu0 0.0
    %501 = vmatprep.subr.mxu0 0.0
    %502 = vmatpush2.msra.mxu0 0.0
    %503 = vmatprep.subr.mxu0 0.0
    %504 = vmatpush2.msra.mxu0 0.0
    %505 = vmatprep.subr.mxu0 0.0
    %506 = vmatpush2.msra.mxu0 0.0
    %507 = vmatprep.subr.mxu0 0.0
    %508 = vmatpush2.msra.mxu0 0.0
    %509 = vmatprep.subr.mxu0 0.0
    %510 = vmatpush2.msra.mxu0 0.0
    %511 = vmatprep.subr.mxu0 0.0
    %512 = vmatpush2.msra.mxu0 0.0
    %513 = vmatprep.subr.mxu0 0.0
    %514 = vmatpush2.msra.mxu0 0.0
    %515 = vmatprep.subr.mxu0 0.0
    %516 = vmatpush2.msra.mxu0 0.0
    %517 = vmatprep.subr.mxu0 0.0
    %518 = vmatpush2.msra.mxu0 0.0
    %519 = vmatprep.subr.mxu0 0.0
    %520 = vmatpush2.msra.mxu0 0.0
    %521 = vmatprep.mubr.f32.mxu0 0.0
    %522 = vmatmul.mubr.f32.gmra.mxu0 %v448
    %v523 = vpop.f32.mrf.mxu0
    %v524 = vadd.f32 %v444, %v523
    %v525 = vpop.f32.mrf.mxu0
    %526 = vmatprep.mubr.f32.mxu0 0.0
    %527 = vmatmul.mubr.f32.gmra.mxu0 %v451
    %v528 = vpop.f32.mrf.mxu0
    %v529 = vadd.f32 %v444, %v528
    %v530 = vpop.f32.mrf.mxu0
    %531 = vdwg.mxu0
    %v532 = vxor.u32 %v524, 2147483648
    %v533 = vxor.u32 %v529, 2147483648
    %v534 = vmul.f32 %v532, 1.442695
    %v535 = vpow.pop %v534
    %v536 = vmul.f32 %v533, 1.442695
    %v537 = vpow.pop %v536
    %v538 = vadd.f32 %v535, 1.0
    %v539 = vadd.f32 %v537, 1.0
    %v540 = vrcp.pop %v538
    %v541 = vmul.f32 1.0, %v540
    %v542 = vrcp.pop %v539
    %v543 = vmul.f32 1.0, %v542
    %v544 = vmul.f32 %v524, %v541
    %v545 = vmul.f32 %v529, %v543
    %v546 = vld [vmem:[%s10] sm:$0xff]
    %v547 = vld [vmem:[%s10 + $0x8] sm:$0xff]
    %v548 = vld [vmem:[%s11] sm:$0x1]
    %v550 = vlaneseq
    %v551 = vshrl.u32 %v550, 7
    %v552 = vsub.s32 0, %v551
    %v553 = vrot.slane %v548, %v552
    %vm555 = vcmask 130048
    %v557 = vsel %vm555, %v544, 0
    %v560 = vsel %vm555, %v545, 0
    %562 = vmatprep.subr.mxu0 0.0
    %563 = vmatpush1.msra.mxu0 0.0
    %564 = vmatprep.subr.mxu0 0.0
    %565 = vmatpush1.msra.mxu0 0.0
    %566 = vmatprep.subr.mxu0 0.0
    %567 = vmatpush1.msra.mxu0 0.0
    %568 = vmatprep.subr.mxu0 0.0
    %569 = vmatpush1.msra.mxu0 0.0
    %570 = vmatprep.subr.mxu0 0.0
    %571 = vmatpush1.msra.mxu0 0.0
    %572 = vmatprep.subr.mxu0 0.0
    %573 = vmatpush1.msra.mxu0 0.0
    %574 = vmatprep.subr.mxu0 0.0
    %575 = vmatpush1.msra.mxu0 0.0
    %576 = vmatprep.subr.mxu0 0.0
    %577 = vmatpush1.msra.mxu0 0.0
    %578 = vmatprep.subr.mxu0 0.0
    %579 = vmatpush1.msra.mxu0 0.0
    %580 = vmatprep.subr.mxu0 0.0
    %581 = vmatpush1.msra.mxu0 0.0
    %582 = vmatprep.subr.mxu0 0.0
    %583 = vmatpush1.msra.mxu0 0.0
    %584 = vmatprep.subr.mxu0 0.0
    %585 = vmatpush1.msra.mxu0 0.0
    %586 = vmatprep.subr.mxu0 0.0
    %587 = vmatpush1.msra.mxu0 0.0
    %588 = vmatprep.subr.mxu0 0.0
    %589 = vmatpush1.msra.mxu0 0.0
    %590 = vmatprep.subr.mxu0 0.0
    %591 = vmatpush1.msra.mxu0 %v547
    %592 = vmatprep.subr.mxu0 0.0
    %593 = vmatpush1.msra.mxu0 %v546
    %594 = vmatprep.subr.mxu0 0.0
    %595 = vmatpush2.msra.mxu0 0.0
    %596 = vmatprep.subr.mxu0 0.0
    %597 = vmatpush2.msra.mxu0 0.0
    %598 = vmatprep.subr.mxu0 0.0
    %599 = vmatpush2.msra.mxu0 0.0
    %600 = vmatprep.subr.mxu0 0.0
    %601 = vmatpush2.msra.mxu0 0.0
    %602 = vmatprep.subr.mxu0 0.0
    %603 = vmatpush2.msra.mxu0 0.0
    %604 = vmatprep.subr.mxu0 0.0
    %605 = vmatpush2.msra.mxu0 0.0
    %606 = vmatprep.subr.mxu0 0.0
    %607 = vmatpush2.msra.mxu0 0.0
    %608 = vmatprep.subr.mxu0 0.0
    %609 = vmatpush2.msra.mxu0 0.0
    %610 = vmatprep.subr.mxu0 0.0
    %611 = vmatpush2.msra.mxu0 0.0
    %612 = vmatprep.subr.mxu0 0.0
    %613 = vmatpush2.msra.mxu0 0.0
    %614 = vmatprep.subr.mxu0 0.0
    %615 = vmatpush2.msra.mxu0 0.0
    %616 = vmatprep.subr.mxu0 0.0
    %617 = vmatpush2.msra.mxu0 0.0
    %618 = vmatprep.subr.mxu0 0.0
    %619 = vmatpush2.msra.mxu0 0.0
    %620 = vmatprep.subr.mxu0 0.0
    %621 = vmatpush2.msra.mxu0 0.0
    %622 = vmatprep.subr.mxu0 0.0
    %623 = vmatpush2.msra.mxu0 0.0
    %624 = vmatprep.subr.mxu0 0.0
    %625 = vmatpush2.msra.mxu0 0.0
    %626 = vmatprep.mubr.f32.mxu0 0.0
    %627 = vmatmul.mubr.f32.gmra.mxu0 %v557
    %v628 = vpop.f32.mrf.mxu0
    %v629 = vadd.f32 %v553, %v628
    %v630 = vpop.f32.mrf.mxu0
    %631 = vmatprep.mubr.f32.mxu0 0.0
    %632 = vmatmul.mubr.f32.gmra.mxu0 %v560
    %v633 = vpop.f32.mrf.mxu0
    %v634 = vadd.f32 %v553, %v633
    %v635 = vpop.f32.mrf.mxu0
    %636 = vdwg.mxu0
    %v637 = vxor.u32 %v629, 2147483648
    %v638 = vxor.u32 %v634, 2147483648
    %v639 = vmul.f32 %v637, 1.442695
    %v640 = vpow.pop %v639
    %v641 = vmul.f32 %v638, 1.442695
    %v642 = vpow.pop %v641
    %v643 = vadd.f32 %v640, 1.0
    %v644 = vadd.f32 %v642, 1.0
    %v645 = vrcp.pop %v643
    %v646 = vmul.f32 1.0, %v645
    %v647 = vrcp.pop %v644
    %v648 = vmul.f32 1.0, %v647
    %v649 = vld [vmem:[%s9] sm:$0xf]
    %vm650 = vcmask 31744
    %v652 = vsel %vm650, %v220, 0
    %v655 = vsel %vm650, %v225, 0
    %v658 = vsel %vm650, %v230, 0
    %v661 = vsel %vm650, %v235, 0
    %v664 = vsel %vm650, %v240, 0
    %v667 = vsel %vm650, %v245, 0
    %vm669 = vcmask 1043456
    %v671 = vsel %vm669, %v649, 0
    %673 = vmatprep.subr.mxu0 0.0
    %674 = vmatpush1.msra.mxu0 0.0
    %675 = vmatprep.subr.mxu0 0.0
    %676 = vmatpush1.msra.mxu0 0.0
    %677 = vmatprep.subr.mxu0 0.0
    %678 = vmatpush1.msra.mxu0 0.0
    %679 = vmatprep.subr.mxu0 0.0
    %680 = vmatpush1.msra.mxu0 0.0
    %681 = vmatprep.subr.mxu0 0.0
    %682 = vmatpush1.msra.mxu0 0.0
    %683 = vmatprep.subr.mxu0 0.0
    %684 = vmatpush1.msra.mxu0 0.0
    %685 = vmatprep.subr.mxu0 0.0
    %686 = vmatpush1.msra.mxu0 0.0
    %687 = vmatprep.subr.mxu0 0.0
    %688 = vmatpush1.msra.mxu0 0.0
    %689 = vmatprep.subr.mxu0 0.0
    %690 = vmatpush1.msra.mxu0 0.0
    %691 = vmatprep.subr.mxu0 0.0
    %692 = vmatpush1.msra.mxu0 0.0
    %693 = vmatprep.subr.mxu0 0.0
    %694 = vmatpush1.msra.mxu0 0.0
    %695 = vmatprep.subr.mxu0 0.0
    %696 = vmatpush1.msra.mxu0 0.0
    %697 = vmatprep.subr.mxu0 0.0
    %698 = vmatpush1.msra.mxu0 0.0
    %699 = vmatprep.subr.mxu0 0.0
    %700 = vmatpush1.msra.mxu0 0.0
    %701 = vmatprep.subr.mxu0 0.0
    %702 = vmatpush1.msra.mxu0 0.0
    %703 = vmatprep.subr.mxu0 0.0
    %704 = vmatpush1.msra.mxu0 %v671
    %705 = vmatprep.subr.mxu0 0.0
    %706 = vmatpush2.msra.mxu0 0.0
    %707 = vmatprep.subr.mxu0 0.0
    %708 = vmatpush2.msra.mxu0 0.0
    %709 = vmatprep.subr.mxu0 0.0
    %710 = vmatpush2.msra.mxu0 0.0
    %711 = vmatprep.subr.mxu0 0.0
    %712 = vmatpush2.msra.mxu0 0.0
    %713 = vmatprep.subr.mxu0 0.0
    %714 = vmatpush2.msra.mxu0 0.0
    %715 = vmatprep.subr.mxu0 0.0
    %716 = vmatpush2.msra.mxu0 0.0
    %717 = vmatprep.subr.mxu0 0.0
    %718 = vmatpush2.msra.mxu0 0.0
    %719 = vmatprep.subr.mxu0 0.0
    %720 = vmatpush2.msra.mxu0 0.0
    %721 = vmatprep.subr.mxu0 0.0
    %722 = vmatpush2.msra.mxu0 0.0
    %723 = vmatprep.subr.mxu0 0.0
    %724 = vmatpush2.msra.mxu0 0.0
    %725 = vmatprep.subr.mxu0 0.0
    %726 = vmatpush2.msra.mxu0 0.0
    %727 = vmatprep.subr.mxu0 0.0
    %728 = vmatpush2.msra.mxu0 0.0
    %729 = vmatprep.subr.mxu0 0.0
    %730 = vmatpush2.msra.mxu0 0.0
    %731 = vmatprep.subr.mxu0 0.0
    %732 = vmatpush2.msra.mxu0 0.0
    %733 = vmatprep.subr.mxu0 0.0
    %734 = vmatpush2.msra.mxu0 0.0
    %735 = vmatprep.subr.mxu0 0.0
    %736 = vmatpush2.msra.mxu0 0.0
    %737 = vmatprep.mubr.f32.mxu0 0.0
    %738 = vmatmul.mubr.f32.gmra.mxu0 %v652
    %v739 = vpop.f32.mrf.mxu0
    %v740 = vadd.f32 0.0, %v739
    %v741 = vpop.f32.mrf.mxu0
    %742 = vmatprep.mubr.f32.mxu0 0.0
    %743 = vmatmul.mubr.f32.gmra.mxu0 %v655
    %v744 = vpop.f32.mrf.mxu0
    %v745 = vadd.f32 0.0, %v744
    %v746 = vpop.f32.mrf.mxu0
    %747 = vmatprep.mubr.f32.mxu0 0.0
    %748 = vmatmul.mubr.f32.gmra.mxu0 %v658
    %v749 = vpop.f32.mrf.mxu0
    %v750 = vadd.f32 0.0, %v749
    %v751 = vpop.f32.mrf.mxu0
    %752 = vmatprep.mubr.f32.mxu0 0.0
    %753 = vmatmul.mubr.f32.gmra.mxu0 %v661
    %v754 = vpop.f32.mrf.mxu0
    %v755 = vadd.f32 0.0, %v754
    %v756 = vpop.f32.mrf.mxu0
    %757 = vmatprep.mubr.f32.mxu0 0.0
    %758 = vmatmul.mubr.f32.gmra.mxu0 %v664
    %v759 = vpop.f32.mrf.mxu0
    %v760 = vadd.f32 0.0, %v759
    %v761 = vpop.f32.mrf.mxu0
    %762 = vmatprep.mubr.f32.mxu0 0.0
    %763 = vmatmul.mubr.f32.gmra.mxu0 %v667
    %v764 = vpop.f32.mrf.mxu0
    %v765 = vadd.f32 0.0, %v764
    %v766 = vpop.f32.mrf.mxu0
    %767 = vdwg.mxu0
    %768 = vst.msk [vmem:[#allocation2] sm:$0xff] %vm555, %v544
    %769 = vst.msk [vmem:[#allocation2 + $0x8] sm:$0xff] %vm555, %v545
    %v770 = vmul.f32 %v740, %v646
    %v771 = vmul.f32 %v745, %v648
    %772 = vst.msk [vmem:[%s13] sm:$0xff] %vm650, %v770
    %773 = vst.msk [vmem:[%s13 + $0x8] sm:$0xff] %vm650, %v771
    %v774 = vmul.f32 %v750, %v646
    %v775 = vmul.f32 %v755, %v648
    %s776 = scalar_lea.vmem %s13, 16
    %777 = vst.msk [vmem:[%s776] sm:$0xff] %vm650, %v774
    %778 = vst.msk [vmem:[%s776 + $0x8] sm:$0xff] %vm650, %v775
    %v779 = vmul.f32 %v760, %v646
    %v780 = vmul.f32 %v765, %v648
    %s781 = scalar_lea.vmem %s13, 32
    %782 = vst.msk [vmem:[%s781] sm:$0xff] %vm650, %v779
    %783 = vst.msk [vmem:[%s781 + $0x8] sm:$0xff] %vm650, %v780
    // Predicated region
    $region50: #{gcp_embedding_forward.3} parent=1 // pred_check
      _
    $region51: #{gcp_embedding_forward.3} parent=1 // pred_check_branch
      %785 = sbr.rel (0) target = $region53
    $region52: #{gcp_embedding_forward.3} parent=1 // pred_region
      %s787 = ssub.s32 256, 256
      %788 = vsyncadd [#allocation3], %s787
      %s789 = sshll.u32 [#allocation2], 4
      %s790 = int_to_ptr.vmem [resolvable:$true] %s789
      %795 = dma.vmem_to_hbm [thread:$0]  %s790, 256, %s12, [#allocation3], 128, 128, 8
    $region53: #{gcp_embedding_forward.3} parent=1 // pred_fallthru
      _
    // Predicated region
    $region54: #{gcp_embedding_forward.3} parent=1 // pred_check
      _
    $region55: #{gcp_embedding_forward.3} parent=1 // pred_check_branch
      %797 = sbr.rel (0) target = $region57
    $region56: #{gcp_embedding_forward.3} parent=1 // pred_region
      _
    $region57: #{gcp_embedding_forward.3} parent=1 // pred_fallthru
      _
    // Predicated region
    $region58: #{gcp_embedding_forward.3} parent=1 // pred_check
      _
    $region59: #{gcp_embedding_forward.3} parent=1 // pred_check_branch
      %799 = sbr.rel (0) target = $region61
    $region60: #{gcp_embedding_forward.3} parent=1 // pred_region
      %800 = dma.done [#allocation3], 256
    $region61: #{gcp_embedding_forward.3} parent=1 // pred_fallthru
      _
    // Predicated region
    $region62: #{gcp_embedding_forward.3} parent=1 // pred_check
      _
    $region63: #{gcp_embedding_forward.3} parent=1 // pred_check_branch
      %802 = sbr.rel (0) target = $region65
    $region64: #{gcp_embedding_forward.3} parent=1 // pred_region
      _
    $region65: #{gcp_embedding_forward.3} parent=1 // pred_fallthru
      _
    %803 = vsyncpa [#allocation3], 1

</llo_original>
